<compile_context>
chip_gen: v6e
topology: v6e:2x2x1
jax: 0.10.0
libtpu: 0.0.40
codegen_flags: <defaults>
</compile_context>

<pallas_src>
import functools
import math

import jax
import jax.numpy as jnp
from jax import lax
from jax.experimental import pallas as pl
from jax.experimental.pallas import tpu as pltpu


# --------------------------------------------------------------------------- #
# Prologue: K/V projection (one fused GEMM -> lane-dense 2*dim MXU output)
# --------------------------------------------------------------------------- #
def _kv_proj_kernel(x_ref, wkv_ref, k_ref, v_ref, *, dim):
    """x_ref: (1, TN, dim) bf16; wkv_ref: (2*dim, dim) bf16; k/v_ref: (1, TN, dim) bf16."""
    dn = (((1,), (1,)), ((), ()))                      # contract last dims (A @ B^T)
    kv = lax.dot_general(x_ref[0], wkv_ref[...], dn,
                         preferred_element_type=jnp.float32)       # (TN, 2*dim) f32 acc
    k_ref[0] = kv[:, :dim].astype(jnp.bfloat16)
    v_ref[0] = kv[:, dim:].astype(jnp.bfloat16)


# --------------------------------------------------------------------------- #
# Main fused attention kernel: Q proj + scores + softmax + P@V + out proj(+bias)
# --------------------------------------------------------------------------- #
def _attn_kernel(ctx_ref, k_ref, v_ref, wq_ref, wout_ref, bout_ref,
                 y_ref, attn_ref, *, n_valid, n_pad):
    """One (batch, query-tile) grid step.

    ctx_ref  : (1, TQ, Cctx)   bf16 query-token tile of the context
    k_ref    : (1, N_pad, dim) bf16 projected keys   (re-fetched per batch only)
    v_ref    : (1, N_pad, dim) bf16 projected values (re-fetched per batch only)
    wq_ref   : (dim, Cctx)     bf16 to_q weight, pre-scaled by 1/sqrt(dim)
    wout_ref : (dim, dim)      bf16 to_out weight
    bout_ref : (dim, 1)        f32  to_out bias (column vector)
    y_ref    : (1, dim, TQ)    f32  transposed output tile (lane-dense store)
    attn_ref : (1, TQ, N_pad)  attention probabilities (bf16 by default, lane-dense)
    """
    dn = (((1,), (1,)), ((), ()))                      # contract last dims (A @ B^T)

    # Q projection for this query tile (scale already folded into Wq).
    q = lax.dot_general(ctx_ref[0], wq_ref[...], dn,
                        preferred_element_type=jnp.float32)        # (TQ, dim) f32

    # Scores + numerically stable softmax (statistics in f32).
    s = lax.dot_general(q.astype(jnp.bfloat16), k_ref[0], dn,
                        preferred_element_type=jnp.float32)        # (TQ, N_pad)
    if n_valid != n_pad:                               # mask zero-padded key tokens
        key_idx = lax.broadcasted_iota(jnp.int32, s.shape, 1)
        s = jnp.where(key_idx < n_valid, s, -jnp.inf)
    s = s - jnp.max(s, axis=-1, keepdims=True)
    p = jnp.exp(s)
    denom = jnp.sum(p, axis=-1, keepdims=True)
    attn = p * pl.reciprocal(denom, approx=True)       # EUP reciprocal, off the VPU path

    # Store the probabilities once (bf16 halves the dominant HBM write) and reuse the same
    # bf16 tensor for the P@V matmul — no second astype.
    attn_bf = attn.astype(jnp.bfloat16)
    if attn_ref.dtype == jnp.bfloat16:
        attn_ref[0] = attn_bf
    else:
        attn_ref[0] = attn.astype(attn_ref.dtype)

    out = lax.dot_general(attn_bf, v_ref[0], (((1,), (0,)), ((), ())),
                          preferred_element_type=jnp.float32)      # (TQ, dim)

    # Output projection computed transposed -> (dim, TQ): lane-dense store, and the wrapper
    # needs no post-kernel transpose.
    y_t = lax.dot_general(wout_ref[...], out.astype(jnp.bfloat16), dn,
                          preferred_element_type=jnp.float32)      # (dim, TQ)
    y_ref[0] = y_t + bout_ref[...]


# --------------------------------------------------------------------------- #
# Wrapper: layout glue, padding, bf16 casts, tile/VMEM budgeting
# --------------------------------------------------------------------------- #
def _vmem_budget_bytes():
    """Chip-aware scoped-VMEM budget: ~3/4 of physical, capped at 96 MiB; 48 MiB fallback
    (safe on v7x's 64 MiB per TensorCore)."""
    cap = 0
    try:
        info = pltpu.get_tpu_info()
        for name in ("vmem_capacity_bytes", "vmem_size_bytes", "vmem_bytes"):
            cap = getattr(info, name, 0) or 0
            if cap:
                break
    except Exception:
        cap = 0
    if not cap:
        return 48 * 1024 * 1024
    return min(int(cap) * 3 // 4, 96 * 1024 * 1024)


def _select_query_tile(n_pad, dim, cctx, attn_itemsize, budget, max_query_tile=None):
    """Largest query tile in {512, 256, 128} that divides n_pad and fits the VMEM budget."""
    weight_bytes = (dim * cctx + 3 * dim * dim) * 2 + dim * 4
    kv_bytes = 2 * 2 * n_pad * dim * 2                 # K + V inputs, double-buffered bf16
    for tq in (512, 256, 128):
        if n_pad % tq or (max_query_tile is not None and tq > max_query_tile):
            continue
        est = (2 * tq * n_pad * attn_itemsize          # attn out tiles (double-buffered)
               + 2 * dim * tq * 4                      # y out tiles (f32, double-buffered)
               + 2 * tq * cctx * 2                     # ctx in tiles (bf16, double-buffered)
               + kv_bytes + weight_bytes)
        if est <= budget:
            return tq
    return 128


def cross_attention_pallas(x, context, params, attn_dtype=jnp.bfloat16,
                           max_query_tile=None):
    """CrossAttention forward.

    x       : (B, dim, H, W)          float32 NCHW
    context : (B, context_dim, H, W)  float32 NCHW
    returns : (to_out(attn @ v) as (B, dim, H, W) float32,
               attn as (B, N, N) in `attn_dtype`), N = H*W.

    Pass attn_dtype=jnp.float32 for full-precision attention probabilities at ~2x the HBM
    write cost.
    """
    wq, wk, wv = params["wq"], params["wk"], params["wv"]
    wout, bout = params["wout"], params["bout"]

    B, dim, H, W = x.shape
    cctx = context.shape[1]
    N = H * W
    n_pad = ((N + 127) // 128) * 128                   # lane-multiple token count

    budget = _vmem_budget_bytes()
    attn_itemsize = jnp.dtype(attn_dtype).itemsize
    tq = _select_query_tile(n_pad, dim, cctx, attn_itemsize, budget, max_query_tile)
    nq = n_pad // tq

    # ---- layout glue (token-major), zero-padding and bf16 casts, all outside the kernel --
    x_t = x.reshape(B, dim, N).transpose(0, 2, 1)            # (B, N, dim)
    ctx_t = context.reshape(B, cctx, N).transpose(0, 2, 1)   # (B, N, cctx)
    if n_pad != N:
        pad = ((0, 0), (0, n_pad - N), (0, 0))
        x_t = jnp.pad(x_t, pad)
        ctx_t = jnp.pad(ctx_t, pad)
    x_t = x_t.astype(jnp.bfloat16)
    ctx_t = ctx_t.astype(jnp.bfloat16)

    scale = 1.0 / math.sqrt(dim)
    wq_b = (wq * scale).astype(jnp.bfloat16)                 # fold 1/sqrt(dim) into Wq
    wkv_b = jnp.concatenate([wk, wv], axis=0).astype(jnp.bfloat16)   # (2*dim, dim)
    wout_b = wout.astype(jnp.bfloat16)
    bout_c = bout.reshape(dim, 1).astype(jnp.float32)

    # ---- prologue: project K and V once per token, bf16 outputs --------------------------
    k_t, v_t = pl.pallas_call(
        functools.partial(_kv_proj_kernel, dim=dim),
        out_shape=(jax.ShapeDtypeStruct((B, n_pad, dim), jnp.bfloat16),
                   jax.ShapeDtypeStruct((B, n_pad, dim), jnp.bfloat16)),
        grid=(B, nq),
        in_specs=[
            pl.BlockSpec((1, tq, dim), lambda b, t: (b, t, 0)),      # x token tile
            pl.BlockSpec((2 * dim, dim), lambda b, t: (0, 0)),       # [Wk; Wv]
        ],
        out_specs=(
            pl.BlockSpec((1, tq, dim), lambda b, t: (b, t, 0)),      # K tile
            pl.BlockSpec((1, tq, dim), lambda b, t: (b, t, 0)),      # V tile
        ),
        compiler_params=pltpu.CompilerParams(
            dimension_semantics=("parallel", "parallel")),
    )(x_t, wkv_b)

    # ---- main fused attention kernel ------------------------------------------------------
    kernel = functools.partial(_attn_kernel, n_valid=N, n_pad=n_pad)
    y_t, attn = pl.pallas_call(
        kernel,
        out_shape=(jax.ShapeDtypeStruct((B, dim, n_pad), jnp.float32),
                   jax.ShapeDtypeStruct((B, n_pad, n_pad), attn_dtype)),
        grid=(B, nq),
        in_specs=[
            pl.BlockSpec((1, tq, cctx), lambda b, qi: (b, qi, 0)),   # context query tile
            pl.BlockSpec((1, n_pad, dim), lambda b, qi: (b, 0, 0)),  # K (fetched per batch)
            pl.BlockSpec((1, n_pad, dim), lambda b, qi: (b, 0, 0)),  # V (fetched per batch)
            pl.BlockSpec((dim, cctx), lambda b, qi: (0, 0)),         # Wq (pre-scaled)
            pl.BlockSpec((dim, dim), lambda b, qi: (0, 0)),          # Wout
            pl.BlockSpec((dim, 1), lambda b, qi: (0, 0)),            # bout
        ],
        out_specs=(
            pl.BlockSpec((1, dim, tq), lambda b, qi: (b, 0, qi)),    # y^T tile (lane-dense)
            pl.BlockSpec((1, tq, n_pad), lambda b, qi: (b, qi, 0)),  # attn tile (lane-dense)
        ),
        compiler_params=pltpu.CompilerParams(
            dimension_semantics=("parallel", "parallel"),            # both axes megacore-able
            vmem_limit_bytes=budget),
    )(ctx_t, k_t, v_t, wq_b, wout_b, bout_c)

    y = y_t[:, :, :N].reshape(B, dim, H, W)
    attn = attn[:, :N, :N]
    return y, attn


# --------------------------------------------------------------------------- #
# Pure-JAX reference (sanity check only)
# --------------------------------------------------------------------------- #
def cross_attention_ref(x, context, params):
    B, dim, H, W = x.shape
    N = H * W
    xf = x.reshape(B, dim, N)
    cf = context.reshape(B, -1, N)
    q = jnp.einsum("oc,bcn->bno", params["wq"], cf)
    k = jnp.einsum("oc,bcn->bno", params["wk"], xf)
    v = jnp.einsum("oc,bcn->bno", params["wv"], xf)
    attn = jax.nn.softmax(
        jnp.einsum("bnc,bmc->bnm", q, k) / math.sqrt(dim), axis=-1)
    out = jnp.einsum("bnm,bmc->bnc", attn, v)
    y = jnp.einsum("oc,bnc->bon", params["wout"], out) + params["bout"][None, :, None]
    return y.reshape(B, dim, H, W), attn


# --------------------------------------------------------------------------- #
def init_params(dim, context_dim, seed=0):
    key = jax.random.PRNGKey(seed)
    k1, k2, k3, k4, k5 = jax.random.split(key, 5)
    return {
        "wq": jax.random.normal(k1, (dim, context_dim), jnp.float32) / math.sqrt(context_dim),
        "wk": jax.random.normal(k2, (dim, dim), jnp.float32) / math.sqrt(dim),
        "wv": jax.random.normal(k3, (dim, dim), jnp.float32) / math.sqrt(dim),
        "wout": jax.random.normal(k4, (dim, dim), jnp.float32) / math.sqrt(dim),
        "bout": 0.01 * jax.random.normal(k5, (dim,), jnp.float32),
    }


if __name__ == "__main__":
    def run_case(B, dim, context_dim, H, W, seed, max_query_tile=None):
        params = init_params(dim, context_dim, seed=seed)
        kx, kc = jax.random.split(jax.random.PRNGKey(0))
        x = jax.random.normal(kx, (B, dim, H, W), jnp.float32)
        context = jax.random.normal(kc, (B, context_dim, H, W), jnp.float32)

        fwd = jax.jit(functools.partial(cross_attention_pallas,
                                        max_query_tile=max_query_tile))
        y, attn = fwd(x, context, params)
        jax.block_until_ready((y, attn))

        # shape / sanity checks against the pure-JAX reference
        # (bf16 MXU + bf16 attn storage -> loose tolerances, intentional)
        y_ref, attn_ref = cross_attention_ref(x, context, params)
        N = H * W
        assert y.shape == (B, dim, H, W), y.shape
        assert attn.shape == (B, N, N), attn.shape
        attn32 = attn.astype(jnp.float32)
        assert jnp.isfinite(y).all() and jnp.isfinite(attn32).all()
        assert jnp.max(jnp.abs(jnp.sum(attn32, axis=-1) - 1.0)) < 1e-2
        assert jnp.max(jnp.abs(attn32 - attn_ref)) < 3e-2
        assert jnp.max(jnp.abs(y - y_ref)) < 5e-2 * (1.0 + jnp.max(jnp.abs(y_ref)))

    # Small pipelined case: N = 256 split into two 128-token query tiles.
    run_case(B=2, dim=64, context_dim=32, H=16, W=16, seed=0, max_query_tile=128)
    # Awkward spatial size: N = 144 is zero-padded to 256 and masked in the softmax.
    run_case(B=1, dim=64, context_dim=64, H=12, W=12, seed=1)

    print("KERNEL_OK")
</pallas_src>

<mosaic_0001>
module attributes {stable_mosaic.version = 11 : i64} {
  func.func @_kv_proj_kernel(%arg0: i32, %arg1: i32, %arg2: memref<1x128x64xbf16, #tpu.memory_space<vmem>>, %arg3: memref<128x64xbf16, #tpu.memory_space<vmem>>, %arg4: memref<1x128x64xbf16, #tpu.memory_space<vmem>>, %arg5: memref<1x128x64xbf16, #tpu.memory_space<vmem>>) attributes {dimension_semantics = [#tpu.dimension_semantics<parallel>, #tpu.dimension_semantics<parallel>], iteration_bounds = array<i64: 2, 2>, scalar_prefetch = 0 : i64, scratch_operands = 0 : i64, tpu.core_type = #tpu.core_type<tc>, window_params = [{transform_indices = @transform_0, window_bounds = array<i64: 1, 128, 64>}, {pipeline_mode = #tpu.pipeline_mode<synchronous>, transform_indices = @transform_1, window_bounds = array<i64: 128, 64>}, {transform_indices = @transform_2, window_bounds = array<i64: 1, 128, 64>}, {transform_indices = @transform_3, window_bounds = array<i64: 1, 128, 64>}]} {
    %c0 = arith.constant 0 : index
    %c0_0 = arith.constant 0 : index
    %c0_1 = arith.constant 0 : index
    %0 = vector.load %arg2[%c0, %c0_0, %c0_1] : memref<1x128x64xbf16, #tpu.memory_space<vmem>>, vector<1x128x64xbf16>
    %1 = vector.shape_cast %0 : vector<1x128x64xbf16> to vector<128x64xbf16>
    %c0_2 = arith.constant 0 : index
    %c0_3 = arith.constant 0 : index
    %2 = vector.load %arg3[%c0_2, %c0_3] : memref<128x64xbf16, #tpu.memory_space<vmem>>, vector<128x64xbf16>
    %cst = arith.constant dense<0.000000e+00> : vector<128x128xf32>
    %3 = tpu.matmul %1, %2, %cst {dimension_numbers = #tpu.dot_dimension_numbers<[1], [1], [0], [0], [0, 0, 1, 0], [], []>} : vector<128x64xbf16>, vector<128x64xbf16>, vector<128x128xf32> -> vector<128x128xf32>
    %4 = vector.extract_strided_slice %3 {offsets = [0, 0], sizes = [128, 64], strides = [1, 1]} : vector<128x128xf32> to vector<128x64xf32>
    %5 = arith.truncf %4 : vector<128x64xf32> to vector<128x64xbf16>
    %c0_4 = arith.constant 0 : index
    %c0_5 = arith.constant 0 : index
    %c0_6 = arith.constant 0 : index
    %6 = vector.load %arg4[%c0_4, %c0_5, %c0_6] : memref<1x128x64xbf16, #tpu.memory_space<vmem>>, vector<1x128x64xbf16>
    %7 = vector.shape_cast %6 : vector<1x128x64xbf16> to vector<128x64xbf16>
    %8 = vector.shape_cast %5 : vector<128x64xbf16> to vector<1x128x64xbf16>
    tpu.vector_store %arg4[%c0_4, %c0_5, %c0_6], %8 {strides = array<i32>} : memref<1x128x64xbf16, #tpu.memory_space<vmem>>, vector<1x128x64xbf16>,
    %9 = vector.extract_strided_slice %3 {offsets = [0, 64], sizes = [128, 64], strides = [1, 1]} : vector<128x128xf32> to vector<128x64xf32>
    %10 = arith.truncf %9 : vector<128x64xf32> to vector<128x64xbf16>
    %c0_7 = arith.constant 0 : index
    %c0_8 = arith.constant 0 : index
    %c0_9 = arith.constant 0 : index
    %11 = vector.load %arg5[%c0_7, %c0_8, %c0_9] : memref<1x128x64xbf16, #tpu.memory_space<vmem>>, vector<1x128x64xbf16>
    %12 = vector.shape_cast %11 : vector<1x128x64xbf16> to vector<128x64xbf16>
    %13 = vector.shape_cast %10 : vector<128x64xbf16> to vector<1x128x64xbf16>
    tpu.vector_store %arg5[%c0_7, %c0_8, %c0_9], %13 {strides = array<i32>} : memref<1x128x64xbf16, #tpu.memory_space<vmem>>, vector<1x128x64xbf16>,
    return
  }
  func.func @transform_0(%arg0: i32, %arg1: i32) -> (i32, i32, i32) {
    %c0_i32 = arith.constant 0 : i32
    %c0_i32_0 = arith.constant 0 : i32
    return %arg0, %arg1, %c0_i32 : i32, i32, i32
  }
  func.func @transform_1(%arg0: i32, %arg1: i32) -> (i32, i32) {
    %c0_i32 = arith.constant 0 : i32
    %c0_i32_0 = arith.constant 0 : i32
    %c0_i32_1 = arith.constant 0 : i32
    return %c0_i32, %c0_i32_0 : i32, i32
  }
  func.func @transform_2(%arg0: i32, %arg1: i32) -> (i32, i32, i32) {
    %c0_i32 = arith.constant 0 : i32
    %c0_i32_0 = arith.constant 0 : i32
    return %arg0, %arg1, %c0_i32 : i32, i32, i32
  }
  func.func @transform_3(%arg0: i32, %arg1: i32) -> (i32, i32, i32) {
    %c0_i32 = arith.constant 0 : i32
    %c0_i32_0 = arith.constant 0 : i32
    return %arg0, %arg1, %c0_i32 : i32, i32, i32
  }
}

module attributes {stable_mosaic.version = 11 : i64} {
  func.func @_attn_kernel(%arg0: i32, %arg1: i32, %arg2: memref<1x128x32xbf16, #tpu.memory_space<vmem>>, %arg3: memref<1x256x64xbf16, #tpu.memory_space<vmem>>, %arg4: memref<1x256x64xbf16, #tpu.memory_space<vmem>>, %arg5: memref<64x32xbf16, #tpu.memory_space<vmem>>, %arg6: memref<64x64xbf16, #tpu.memory_space<vmem>>, %arg7: memref<64x1xf32, #tpu.memory_space<vmem>>, %arg8: memref<1x64x128xf32, #tpu.memory_space<vmem>>, %arg9: memref<1x128x256xbf16, #tpu.memory_space<vmem>>) attributes {dimension_semantics = [#tpu.dimension_semantics<parallel>, #tpu.dimension_semantics<parallel>], iteration_bounds = array<i64: 2, 2>, scalar_prefetch = 0 : i64, scratch_operands = 0 : i64, tpu.core_type = #tpu.core_type<tc>, window_params = [{transform_indices = @transform_0, window_bounds = array<i64: 1, 128, 32>}, {transform_indices = @transform_1, window_bounds = array<i64: 1, 256, 64>}, {transform_indices = @transform_2, window_bounds = array<i64: 1, 256, 64>}, {pipeline_mode = #tpu.pipeline_mode<synchronous>, transform_indices = @transform_3, window_bounds = array<i64: 64, 32>}, {pipeline_mode = #tpu.pipeline_mode<synchronous>, transform_indices = @transform_4, window_bounds = array<i64: 64, 64>}, {pipeline_mode = #tpu.pipeline_mode<synchronous>, transform_indices = @transform_5, window_bounds = array<i64: 64, 1>}, {transform_indices = @transform_6, window_bounds = array<i64: 1, 64, 128>}, {transform_indices = @transform_7, window_bounds = array<i64: 1, 128, 256>}]} {
    %c0 = arith.constant 0 : index
    %c0_0 = arith.constant 0 : index
    %c0_1 = arith.constant 0 : index
    %0 = vector.load %arg2[%c0, %c0_0, %c0_1] : memref<1x128x32xbf16, #tpu.memory_space<vmem>>, vector<1x128x32xbf16>
    %1 = vector.shape_cast %0 : vector<1x128x32xbf16> to vector<128x32xbf16>
    %c0_2 = arith.constant 0 : index
    %c0_3 = arith.constant 0 : index
    %2 = vector.load %arg5[%c0_2, %c0_3] : memref<64x32xbf16, #tpu.memory_space<vmem>>, vector<64x32xbf16>
    %cst = arith.constant dense<0.000000e+00> : vector<128x64xf32>
    %3 = tpu.matmul %1, %2, %cst {dimension_numbers = #tpu.dot_dimension_numbers<[1], [1], [0], [0], [0, 0, 1, 0], [], []>} : vector<128x32xbf16>, vector<64x32xbf16>, vector<128x64xf32> -> vector<128x64xf32>
    %4 = arith.truncf %3 : vector<128x64xf32> to vector<128x64xbf16>
    %c0_4 = arith.constant 0 : index
    %c0_5 = arith.constant 0 : index
    %c0_6 = arith.constant 0 : index
    %5 = vector.load %arg3[%c0_4, %c0_5, %c0_6] : memref<1x256x64xbf16, #tpu.memory_space<vmem>>, vector<1x256x64xbf16>
    %6 = vector.shape_cast %5 : vector<1x256x64xbf16> to vector<256x64xbf16>
    %cst_7 = arith.constant dense<0.000000e+00> : vector<128x256xf32>
    %7 = tpu.matmul %4, %6, %cst_7 {dimension_numbers = #tpu.dot_dimension_numbers<[1], [1], [0], [0], [0, 0, 1, 0], [], []>} : vector<128x64xbf16>, vector<256x64xbf16>, vector<128x256xf32> -> vector<128x256xf32>
    %cst_8 = arith.constant dense<0xFF800000> : vector<128xf32>
    %8 = vector.multi_reduction <maximumf>, %7, %cst_8 [1] : vector<128x256xf32> to vector<128xf32>
    %9 = vector.shape_cast %8 : vector<128xf32> to vector<128x1xf32>
    %10 = vector.broadcast %9 : vector<128x1xf32> to vector<128x256xf32>
    %11 = arith.subf %7, %10 : vector<128x256xf32>
    %12 = math.exp %11 : vector<128x256xf32>
    %cst_9 = arith.constant dense<0.000000e+00> : vector<128xf32>
    %13 = vector.multi_reduction <add>, %12, %cst_9 [1] : vector<128x256xf32> to vector<128xf32>
    %14 = vector.shape_cast %13 : vector<128xf32> to vector<128x1xf32>
    %15 = tpu.reciprocal %14 {approx = true} : vector<128x1xf32> -> vector<128x1xf32>
    %16 = vector.broadcast %15 : vector<128x1xf32> to vector<128x256xf32>
    %17 = arith.mulf %12, %16 : vector<128x256xf32>
    %18 = arith.truncf %17 : vector<128x256xf32> to vector<128x256xbf16>
    %c0_10 = arith.constant 0 : index
    %c0_11 = arith.constant 0 : index
    %c0_12 = arith.constant 0 : index
    %19 = vector.load %arg9[%c0_10, %c0_11, %c0_12] : memref<1x128x256xbf16, #tpu.memory_space<vmem>>, vector<1x128x256xbf16>
    %20 = vector.shape_cast %19 : vector<1x128x256xbf16> to vector<128x256xbf16>
    %21 = vector.shape_cast %18 : vector<128x256xbf16> to vector<1x128x256xbf16>
    tpu.vector_store %arg9[%c0_10, %c0_11, %c0_12], %21 {strides = array<i32>} : memref<1x128x256xbf16, #tpu.memory_space<vmem>>, vector<1x128x256xbf16>,
    %c0_13 = arith.constant 0 : index
    %c0_14 = arith.constant 0 : index
    %c0_15 = arith.constant 0 : index
    %22 = vector.load %arg4[%c0_13, %c0_14, %c0_15] : memref<1x256x64xbf16, #tpu.memory_space<vmem>>, vector<1x256x64xbf16>
    %23 = vector.shape_cast %22 : vector<1x256x64xbf16> to vector<256x64xbf16>
    %cst_16 = arith.constant dense<0.000000e+00> : vector<128x64xf32>
    %24 = tpu.matmul %18, %23, %cst_16 {dimension_numbers = #tpu.dot_dimension_numbers<[1], [0], [0], [1], [0, 0, 1, 1], [], []>} : vector<128x256xbf16>, vector<256x64xbf16>, vector<128x64xf32> -> vector<128x64xf32>
    %c0_17 = arith.constant 0 : index
    %c0_18 = arith.constant 0 : index
    %25 = vector.load %arg6[%c0_17, %c0_18] : memref<64x64xbf16, #tpu.memory_space<vmem>>, vector<64x64xbf16>
    %26 = arith.truncf %24 : vector<128x64xf32> to vector<128x64xbf16>
    %cst_19 = arith.constant dense<0.000000e+00> : vector<64x128xf32>
    %27 = tpu.matmul %25, %26, %cst_19 {dimension_numbers = #tpu.dot_dimension_numbers<[1], [1], [0], [0], [0, 0, 1, 0], [], []>} : vector<64x64xbf16>, vector<128x64xbf16>, vector<64x128xf32> -> vector<64x128xf32>
    %c0_20 = arith.constant 0 : index
    %c0_21 = arith.constant 0 : index
    %28 = vector.load %arg7[%c0_20, %c0_21] : memref<64x1xf32, #tpu.memory_space<vmem>>, vector<64x1xf32>
    %29 = vector.broadcast %28 : vector<64x1xf32> to vector<64x128xf32>
    %30 = arith.addf %27, %29 : vector<64x128xf32>
    %c0_22 = arith.constant 0 : index
    %c0_23 = arith.constant 0 : index
    %c0_24 = arith.constant 0 : index
    %31 = vector.load %arg8[%c0_22, %c0_23, %c0_24] : memref<1x64x128xf32, #tpu.memory_space<vmem>>, vector<1x64x128xf32>
    %32 = vector.shape_cast %31 : vector<1x64x128xf32> to vector<64x128xf32>
    %33 = vector.shape_cast %30 : vector<64x128xf32> to vector<1x64x128xf32>
    tpu.vector_store %arg8[%c0_22, %c0_23, %c0_24], %33 {strides = array<i32>} : memref<1x64x128xf32, #tpu.memory_space<vmem>>, vector<1x64x128xf32>,
    return
  }
  func.func @transform_0(%arg0: i32, %arg1: i32) -> (i32, i32, i32) {
    %c0_i32 = arith.constant 0 : i32
    %c0_i32_0 = arith.constant 0 : i32
    return %arg0, %arg1, %c0_i32 : i32, i32, i32
  }
  func.func @transform_1(%arg0: i32, %arg1: i32) -> (i32, i32, i32) {
    %c0_i32 = arith.constant 0 : i32
    %c0_i32_0 = arith.constant 0 : i32
    %c0_i32_1 = arith.constant 0 : i32
    return %arg0, %c0_i32, %c0_i32_0 : i32, i32, i32
  }
  func.func @transform_2(%arg0: i32, %arg1: i32) -> (i32, i32, i32) {
    %c0_i32 = arith.constant 0 : i32
    %c0_i32_0 = arith.constant 0 : i32
    %c0_i32_1 = arith.constant 0 : i32
    return %arg0, %c0_i32, %c0_i32_0 : i32, i32, i32
  }
  func.func @transform_3(%arg0: i32, %arg1: i32) -> (i32, i32) {
    %c0_i32 = arith.constant 0 : i32
    %c0_i32_0 = arith.constant 0 : i32
    %c0_i32_1 = arith.constant 0 : i32
    return %c0_i32, %c0_i32_0 : i32, i32
  }
  func.func @transform_4(%arg0: i32, %arg1: i32) -> (i32, i32) {
    %c0_i32 = arith.constant 0 : i32
    %c0_i32_0 = arith.constant 0 : i32
    %c0_i32_1 = arith.constant 0 : i32
    return %c0_i32, %c0_i32_0 : i32, i32
  }
  func.func @transform_5(%arg0: i32, %arg1: i32) -> (i32, i32) {
    %c0_i32 = arith.constant 0 : i32
    %c0_i32_0 = arith.constant 0 : i32
    %c0_i32_1 = arith.constant 0 : i32
    return %c0_i32, %c0_i32_0 : i32, i32
  }
  func.func @transform_6(%arg0: i32, %arg1: i32) -> (i32, i32, i32) {
    %c0_i32 = arith.constant 0 : i32
    %c0_i32_0 = arith.constant 0 : i32
    return %arg0, %c0_i32, %arg1 : i32, i32, i32
  }
  func.func @transform_7(%arg0: i32, %arg1: i32) -> (i32, i32, i32) {
    %c0_i32 = arith.constant 0 : i32
    %c0_i32_0 = arith.constant 0 : i32
    return %arg0, %arg1, %c0_i32 : i32, i32, i32
  }
}

</mosaic_0001>

<llo_original>
// kernel: cross_attention_pallas.2
$region0: #{cross_attention_pallas.2}
  #allocation0 [shape = 'u32[]', space=smem, size = 0x4, offset = 0x4, fixed_abs, tag = 'smem constant byte address 0x4 - core index']
  #allocation1 [shape = 'u32[144,128]{1,0:T(1,128)}', space=vmem, size = 0x12000, scoped, tag = 'internal scratch']
  %s0 = inlined_call_operand.vmem [shape: bf16[2,256,64], index: 0, kind: input, shape index: {}]
  %s1 = inlined_call_operand.vmem [shape: bf16[128,64], index: 1, kind: input, shape index: {}]
  %s2 = inlined_call_operand.vmem [shape: bf16[2,256,64], index: 2, kind: output, shape index: {0}]
  %s3 = inlined_call_operand.vmem [shape: bf16[2,256,64], index: 3, kind: output, shape index: {1}]
  %4 = xla_tuple %s2, %s3
  %s5 = sld [smem:[#allocation0]]
  $region49: #{cross_attention_pallas.2} parent=0
    _
  %s7 = ssub.s32 1, %s5
  %s8 = scalar_select 0, %s7, %s5
  loop: start=0, step=1, limit=6
  $region2: #{cross_attention_pallas.2} parent=0 // loop_pre_header
    _
  $region3: #{cross_attention_pallas.2} parent=0 // loop_header
    %s10 = sphi 0, %s14
    %p11 = scmp.ge.s32.totalorder %s10, 6
    %s17 = sphi 0, %s29
    %s18 = sphi 0, %s25
    %s19 = sphi 0, %s17
    %s20 = sphi 0, %s18
    %s21 = sphi 0, %s19
    %s22 = sphi 0, %s20
    %s34 = sphi 0, %s36
    %s37 = sphi 0, %s34
    %s38 = sphi 0, %s37
    %s54 = sphi 0, %s38
    %s58 = sphi 0, %s58
    %s60 = sphi 0, %s58
    %s61 = sphi 0, %s60
    %s75 = sphi 0, %s61
    %s83 = sphi 0, %s85
    %s86 = sphi 0, %s83
    %s87 = sphi 0, %s86
    %s103 = sphi 0, %s87
    %s111 = sphi 0, %s113
    %s114 = sphi 0, %s111
    %s115 = sphi 0, %s114
    %s131 = sphi 0, %s115
  $region4: #{cross_attention_pallas.2} parent=0 // loop_header_branch
    %13 = sbr.rel (%p11) target = $region8
  $region5: #{cross_attention_pallas.2} parent=0 // loop_body
    %s15 = ssub.s32 %s10, 1
    %s16 = ssub.s32 %s10, 2
    %s23 = sadd.s32 1, %s18
    %p24 = scmp.ge.s32.totalorder %s23, 2
    %s25 = scalar_select %p24, 0, %s23
    %s26 = sadd.s32 1, %s17
    %s27 = scalar_select %p24, %s26, %s17
    %p28 = scmp.ge.s32.totalorder %s27, 2
    %s29 = scalar_select %p28, 0, %s27
    %s30 = ssub.s32 %s17, %s29
    %s31 = ssub.s32 %s18, %s25
    %s32 = sor.u32 %s30, %s31
    %p33 = scmp.eq.s32.totalorder %s32, 0
    %s35 = sadd.s32 %s34, 1
    %s36 = scalar_select %p33, %s34, %s35
    %p39 = pneg %p33
    %p40 = scmp.eq.s32.totalorder %s10, 3
    %p41 = por %p39, %p40
    %p42 = scmp.ne.s32.totalorder %s34, %s37
    %p43 = scmp.eq.s32.totalorder %s10, 0
    %p44 = por %p42, %p43
    %p45 = scmp.ne.s32.totalorder %s34, %s37
    %p46 = scmp.eq.s32.totalorder %s15, 3
    %p47 = por %p45, %p46
    %p48 = scmp.ne.s32.totalorder %s37, %s38
    %p49 = scmp.eq.s32.totalorder %s15, 0
    %p50 = por %p48, %p49
    %p51 = scmp.ne.s32.totalorder %s37, %s38
    %p52 = scmp.eq.s32.totalorder %s16, 3
    %p53 = por %p51, %p52
    %p55 = scmp.ne.s32.totalorder %s38, %s54
    %p56 = scmp.eq.s32.totalorder %s16, 0
    %p57 = por %p55, %p56
    %s59 = sadd.s32 %s58, 1
    %p62 = scmp.eq.s32.totalorder %s10, 3
    %p63 = scmp.ne.s32.totalorder %s58, %s60
    %p64 = scmp.eq.s32.totalorder %s10, 0
    %p65 = por %p63, %p64
    %p66 = scmp.ne.s32.totalorder %s58, %s60
    %p67 = scmp.eq.s32.totalorder %s15, 3
    %p68 = por %p66, %p67
    %p69 = scmp.ne.s32.totalorder %s60, %s61
    %p70 = scmp.eq.s32.totalorder %s15, 0
    %p71 = por %p69, %p70
    %p72 = scmp.ne.s32.totalorder %s60, %s61
    %p73 = scmp.eq.s32.totalorder %s16, 3
    %p74 = por %p72, %p73
    %p76 = scmp.ne.s32.totalorder %s61, %s75
    %p77 = scmp.eq.s32.totalorder %s16, 0
    %p78 = por %p76, %p77
    %s79 = ssub.s32 %s17, %s29
    %s80 = ssub.s32 %s18, %s25
    %s81 = sor.u32 %s79, %s80
    %p82 = scmp.eq.s32.totalorder %s81, 0
    %s84 = sadd.s32 %s83, 1
    %s85 = scalar_select %p82, %s83, %s84
    %p88 = pneg %p82
    %p89 = scmp.eq.s32.totalorder %s10, 3
    %p90 = por %p88, %p89
    %p91 = scmp.ne.s32.totalorder %s83, %s86
    %p92 = scmp.eq.s32.totalorder %s10, 0
    %p93 = por %p91, %p92
    %p94 = scmp.ne.s32.totalorder %s83, %s86
    %p95 = scmp.eq.s32.totalorder %s15, 3
    %p96 = por %p94, %p95
    %p97 = scmp.ne.s32.totalorder %s86, %s87
    %p98 = scmp.eq.s32.totalorder %s15, 0
    %p99 = por %p97, %p98
    %p100 = scmp.ne.s32.totalorder %s86, %s87
    %p101 = scmp.eq.s32.totalorder %s16, 3
    %p102 = por %p100, %p101
    %p104 = scmp.ne.s32.totalorder %s87, %s103
    %p105 = scmp.eq.s32.totalorder %s16, 0
    %p106 = por %p104, %p105
    %s107 = ssub.s32 %s17, %s29
    %s108 = ssub.s32 %s18, %s25
    %s109 = sor.u32 %s107, %s108
    %p110 = scmp.eq.s32.totalorder %s109, 0
    %s112 = sadd.s32 %s111, 1
    %s113 = scalar_select %p110, %s111, %s112
    %p116 = pneg %p110
    %p117 = scmp.eq.s32.totalorder %s10, 3
    %p118 = por %p116, %p117
    %p119 = scmp.ne.s32.totalorder %s111, %s114
    %p120 = scmp.eq.s32.totalorder %s10, 0
    %p121 = por %p119, %p120
    %p122 = scmp.ne.s32.totalorder %s111, %s114
    %p123 = scmp.eq.s32.totalorder %s15, 3
    %p124 = por %p122, %p123
    %p125 = scmp.ne.s32.totalorder %s114, %s115
    %p126 = scmp.eq.s32.totalorder %s15, 0
    %p127 = por %p125, %p126
    %p128 = scmp.ne.s32.totalorder %s114, %s115
    %p129 = scmp.eq.s32.totalorder %s16, 3
    %p130 = por %p128, %p129
    %p132 = scmp.ne.s32.totalorder %s115, %s131
    %p133 = scmp.eq.s32.totalorder %s16, 0
    %p134 = por %p132, %p133
    %p135 = scmp.le.s32.totalorder 1, %s10
    %p136 = scmp.lt.s32.totalorder %s10, 5
    %p137 = pnand %p135, %p136
    %p138 = pneg %p137
    // Predicated region
    $region9: #{cross_attention_pallas.2} parent=5 // pred_check
      _
    $region10: #{cross_attention_pallas.2} parent=5 // pred_check_branch
      %140 = sbr.rel (%p137) target = $region12
    $region11: #{cross_attention_pallas.2} parent=5 // pred_region
      %s141 = ssub.s32 %s10, 1
      // Predicated region
      $region13: #{cross_attention_pallas.2} parent=11 // pred_check
        %p142 = pneg %p71
      $region14: #{cross_attention_pallas.2} parent=11 // pred_check_branch
        %144 = sbr.rel (%p142) target = $region16
      $region15: #{cross_attention_pallas.2} parent=11 // pred_region
        _
      $region16: #{cross_attention_pallas.2} parent=11 // pred_fallthru
        _
    $region12: #{cross_attention_pallas.2} parent=5 // pred_fallthru
      _
    %p145 = scmp.lt.s32.totalorder %s10, 4
    // Predicated region
    $region17: #{cross_attention_pallas.2} parent=5 // pred_check
      %p146 = pneg %p145
    $region18: #{cross_attention_pallas.2} parent=5 // pred_check_branch
      %148 = sbr.rel (%p146) target = $region20
    $region19: #{cross_attention_pallas.2} parent=5 // pred_region
      // Predicated region
      $region21: #{cross_attention_pallas.2} parent=19 // pred_check
        %p149 = pneg %p44
      $region22: #{cross_attention_pallas.2} parent=19 // pred_check_branch
        %151 = sbr.rel (%p149) target = $region24
      $region23: #{cross_attention_pallas.2} parent=19 // pred_region
        %s152 = smul.u32 16, %s18
        %p153 = scmp.lt.s32.totalorder %s17, 1
        %s154 = scalar_select %p153, %s17, 1
        %p155 = scmp.lt.s32.totalorder %s152, 31
        %s156 = scalar_select %p155, %s152, 31
        %s157 = smul.addr %s154, 32
        %s158 = sadd.s32 %s156, %s157
        %s159 = smul.addr %s158, 4
        %s160 = scalar_lea.vmem %s0, %s159
        %s161 = smul.u32 16, %s18
      $region24: #{cross_attention_pallas.2} parent=19 // pred_fallthru
        _
    $region20: #{cross_attention_pallas.2} parent=5 // pred_fallthru
      _
    %p162 = scmp.le.s32.totalorder 1, %s10
    %p163 = scmp.lt.s32.totalorder %s10, 5
    %p164 = pnand %p162, %p163
    %p165 = pneg %p164
    // Predicated region
    $region25: #{cross_attention_pallas.2} parent=5 // pred_check
      _
    $region26: #{cross_attention_pallas.2} parent=5 // pred_check_branch
      %167 = sbr.rel (%p164) target = $region28
    $region27: #{cross_attention_pallas.2} parent=5 // pred_region
      %s168 = ssub.s32 %s10, 1
      %s169 = smul.u32 16, %s20
      %p170 = scmp.lt.s32.totalorder %s19, 1
      %s171 = scalar_select %p170, %s19, 1
      %p172 = scmp.lt.s32.totalorder %s169, 31
      %s173 = scalar_select %p172, %s169, 31
      %s174 = smul.addr %s171, 32
      %s175 = sadd.s32 %s173, %s174
      %s176 = smul.addr %s175, 4
      %s177 = scalar_lea.vmem %s0, %s176
      %p178 = pneg %p50
      %p179 = pneg %p47
      %p180 = pneg %p71
      %p181 = pneg %p68
      %p182 = pneg %p99
      %p183 = pneg %p96
      %s184 = smul.u32 16, %s20
      %p185 = scmp.lt.s32.totalorder %s19, 1
      %s186 = scalar_select %p185, %s19, 1
      %p187 = scmp.lt.s32.totalorder %s184, 31
      %s188 = scalar_select %p187, %s184, 31
      %s189 = smul.addr %s186, 32
      %s190 = sadd.s32 %s188, %s189
      %s191 = smul.addr %s190, 4
      %s192 = scalar_lea.vmem %s2, %s191
      %p193 = pneg %p127
      %p194 = pneg %p124
      %s195 = smul.u32 16, %s20
      %p196 = scmp.lt.s32.totalorder %s19, 1
      %s197 = scalar_select %p196, %s19, 1
      %p198 = scmp.lt.s32.totalorder %s195, 31
      %s199 = scalar_select %p198, %s195, 31
      %s200 = smul.addr %s197, 32
      %s201 = sadd.s32 %s199, %s200
      %s202 = smul.addr %s201, 4
      %s203 = scalar_lea.vmem %s3, %s202
      %s204 = smul.u32 16, %s20
      %p205 = scmp.lt.s32.totalorder %s19, 1
      %s206 = scalar_select %p205, %s19, 1
      %p207 = scmp.lt.s32.totalorder %s204, 31
      %s208 = scalar_select %p207, %s204, 31
      %s209 = smul.addr %s206, 32
      %s210 = sadd.s32 %s208, %s209
      %s211 = smul.addr %s210, 4
      %s212 = scalar_lea.vmem %s0, %s211
      %s213 = smul.u32 16, %s20
      %s214 = smul.u32 16, %s20
      %p215 = scmp.lt.s32.totalorder %s19, 1
      %s216 = scalar_select %p215, %s19, 1
      %p217 = scmp.lt.s32.totalorder %s214, 31
      %s218 = scalar_select %p217, %s214, 31
      %s219 = smul.addr %s216, 32
      %s220 = sadd.s32 %s218, %s219
      %s221 = smul.addr %s220, 4
      %s222 = scalar_lea.vmem %s2, %s221
      %s223 = smul.u32 16, %s20
      %s224 = smul.u32 16, %s20
      %p225 = scmp.lt.s32.totalorder %s19, 1
      %s226 = scalar_select %p225, %s19, 1
      %p227 = scmp.lt.s32.totalorder %s224, 31
      %s228 = scalar_select %p227, %s224, 31
      %s229 = smul.addr %s226, 32
      %s230 = sadd.s32 %s228, %s229
      %s231 = smul.addr %s230, 4
      %s232 = scalar_lea.vmem %s3, %s231
      %s233 = smul.u32 16, %s20
      %v235 = vld [vmem:[%s212] sm:$0xf]
      %v236 = vld [vmem:[%s212 + $0x4] sm:$0xf]
      %v237 = vld [vmem:[%s212 + $0x8] sm:$0xf]
      %v238 = vld [vmem:[%s212 + $0xc] sm:$0xf]
      %v239 = vld [vmem:[%s212 + $0x10] sm:$0xf]
      %v240 = vld [vmem:[%s212 + $0x14] sm:$0xf]
      %v241 = vld [vmem:[%s212 + $0x18] sm:$0xf]
      %v242 = vld [vmem:[%s212 + $0x1c] sm:$0xf]
      %v243 = vld [vmem:[%s212 + $0x20] sm:$0xf]
      %v244 = vld [vmem:[%s212 + $0x24] sm:$0xf]
      %v245 = vld [vmem:[%s212 + $0x28] sm:$0xf]
      %v246 = vld [vmem:[%s212 + $0x2c] sm:$0xf]
      %v247 = vld [vmem:[%s212 + $0x30] sm:$0xf]
      %v248 = vld [vmem:[%s212 + $0x34] sm:$0xf]
      %v249 = vld [vmem:[%s212 + $0x38] sm:$0xf]
      %v250 = vld [vmem:[%s212 + $0x3c] sm:$0xf]
      %v251 = vld [vmem:[%s1] sm:$0xf]
      %v252 = vld [vmem:[%s1 + $0x4] sm:$0xf]
      %v253 = vld [vmem:[%s1 + $0x8] sm:$0xf]
      %v254 = vld [vmem:[%s1 + $0xc] sm:$0xf]
      %v255 = vld [vmem:[%s1 + $0x10] sm:$0xf]
      %v256 = vld [vmem:[%s1 + $0x14] sm:$0xf]
      %v257 = vld [vmem:[%s1 + $0x18] sm:$0xf]
      %v258 = vld [vmem:[%s1 + $0x1c] sm:$0xf]
      %v259 = vld [vmem:[%s1 + $0x20] sm:$0xf]
      %v260 = vld [vmem:[%s1 + $0x24] sm:$0xf]
      %v261 = vld [vmem:[%s1 + $0x28] sm:$0xf]
      %v262 = vld [vmem:[%s1 + $0x2c] sm:$0xf]
      %v263 = vld [vmem:[%s1 + $0x30] sm:$0xf]
      %v264 = vld [vmem:[%s1 + $0x34] sm:$0xf]
      %v265 = vld [vmem:[%s1 + $0x38] sm:$0xf]
      %v266 = vld [vmem:[%s1 + $0x3c] sm:$0xf]
      %v283 = vunpack.c.l.b16 %v235
      %v284 = vunpack.c.l.b16 %v236
      %v285 = vunpack.c.l.b16 %v237
      %v286 = vunpack.c.l.b16 %v238
      %v287 = vunpack.c.l.b16 %v239
      %v288 = vunpack.c.l.b16 %v240
      %v289 = vunpack.c.l.b16 %v241
      %v290 = vunpack.c.l.b16 %v242
      %v291 = vunpack.c.l.b16 %v243
      %v292 = vunpack.c.l.b16 %v244
      %v293 = vunpack.c.l.b16 %v245
      %v294 = vunpack.c.l.b16 %v246
      %v295 = vunpack.c.l.b16 %v247
      %v296 = vunpack.c.l.b16 %v248
      %v297 = vunpack.c.l.b16 %v249
      %v298 = vunpack.c.l.b16 %v250
      %v299 = vpack.c.b16 %v284, %v283
      %v300 = vpack.c.b16 %v286, %v285
      %v301 = vpack.c.b16 %v288, %v287
      %v302 = vpack.c.b16 %v290, %v289
      %v303 = vpack.c.b16 %v292, %v291
      %v304 = vpack.c.b16 %v294, %v293
      %v305 = vpack.c.b16 %v296, %v295
      %v306 = vpack.c.b16 %v298, %v297
      %v323 = vunpack.c.l.b16 %v251
      %v324 = vunpack.c.l.b16 %v252
      %v325 = vunpack.c.l.b16 %v253
      %v326 = vunpack.c.l.b16 %v254
      %v327 = vunpack.c.l.b16 %v255
      %v328 = vunpack.c.l.b16 %v256
      %v329 = vunpack.c.l.b16 %v257
      %v330 = vunpack.c.l.b16 %v258
      %v331 = vunpack.c.l.b16 %v259
      %v332 = vunpack.c.l.b16 %v260
      %v333 = vunpack.c.l.b16 %v261
      %v334 = vunpack.c.l.b16 %v262
      %v335 = vunpack.c.l.b16 %v263
      %v336 = vunpack.c.l.b16 %v264
      %v337 = vunpack.c.l.b16 %v265
      %v338 = vunpack.c.l.b16 %v266
      %v339 = vpack.c.b16 %v324, %v323
      %v340 = vpack.c.b16 %v326, %v325
      %v341 = vpack.c.b16 %v328, %v327
      %v342 = vpack.c.b16 %v330, %v329
      %v343 = vpack.c.b16 %v332, %v331
      %v344 = vpack.c.b16 %v334, %v333
      %v345 = vpack.c.b16 %v336, %v335
      %v346 = vpack.c.b16 %v338, %v337
      %vm347 = vcmask 523264
      %v349 = vsel %vm347, %v299, 0
      %v352 = vsel %vm347, %v300, 0
      %v355 = vsel %vm347, %v301, 0
      %v358 = vsel %vm347, %v302, 0
      %v361 = vsel %vm347, %v303, 0
      %v364 = vsel %vm347, %v304, 0
      %v367 = vsel %vm347, %v305, 0
      %v370 = vsel %vm347, %v306, 0
      %v373 = vsel %vm347, %v339, 0
      %v376 = vsel %vm347, %v340, 0
      %v379 = vsel %vm347, %v341, 0
      %v382 = vsel %vm347, %v342, 0
      %v385 = vsel %vm347, %v343, 0
      %v388 = vsel %vm347, %v344, 0
      %v391 = vsel %vm347, %v345, 0
      %v394 = vsel %vm347, %v346, 0
      %396 = vmatprep.subr.bf16.mxu0 0
      %397 = vmatpush1.bf16.xpose.msra.mxu0 %v394
      %398 = vmatprep.subr.bf16.mxu0 0
      %399 = vmatpush1.bf16.xpose.msra.mxu0 %v391
      %400 = vmatprep.subr.bf16.mxu0 0
      %401 = vmatpush1.bf16.xpose.msra.mxu0 %v388
      %402 = vmatprep.subr.bf16.mxu0 0
      %403 = vmatpush1.bf16.xpose.msra.mxu0 %v385
      %404 = vmatprep.subr.bf16.mxu0 0
      %405 = vmatpush1.bf16.xpose.msra.mxu0 %v382
      %406 = vmatprep.subr.bf16.mxu0 0
      %407 = vmatpush1.bf16.xpose.msra.mxu0 %v379
      %408 = vmatprep.subr.bf16.mxu0 0
      %409 = vmatpush1.bf16.xpose.msra.mxu0 %v376
      %410 = vmatprep.subr.bf16.mxu0 0
      %411 = vmatpush1.bf16.xpose.msra.mxu0 %v373
      %412 = vmatprep.subr.bf16.mxu0 0
      %413 = vmatpush2.bf16.xpose.msra.mxu0 0
      %414 = vmatprep.subr.bf16.mxu0 0
      %415 = vmatpush2.bf16.xpose.msra.mxu0 0
      %416 = vmatprep.subr.bf16.mxu0 0
      %417 = vmatpush2.bf16.xpose.msra.mxu0 0
      %418 = vmatprep.subr.bf16.mxu0 0
      %419 = vmatpush2.bf16.xpose.msra.mxu0 0
      %420 = vmatprep.subr.bf16.mxu0 0
      %421 = vmatpush2.bf16.xpose.msra.mxu0 0
      %422 = vmatprep.subr.bf16.mxu0 0
      %423 = vmatpush2.bf16.xpose.msra.mxu0 0
      %424 = vmatprep.subr.bf16.mxu0 0
      %425 = vmatpush2.bf16.xpose.msra.mxu0 0
      %426 = vmatprep.subr.bf16.mxu0 0
      %427 = vmatpush2.bf16.xpose.msra.mxu0 0
      %428 = vmatprep.mubr.bf16.mxu0 0
      %429 = vmatmul.mubr.bf16.gmra.mxu0 %v349
      %v430 = vpop.f32.mrf.mxu0
      %v431 = vadd.f32 0.0, %v430
      %v432 = vpop.f32.mrf.mxu0
      %v433 = vpop.f32.mrf.mxu0
      %v434 = vadd.f32 0.0, %v433
      %v435 = vpop.f32.mrf.mxu0
      %436 = vmatprep.mubr.bf16.mxu0 0
      %437 = vmatmul.mubr.bf16.gmra.mxu0 %v352
      %v438 = vpop.f32.mrf.mxu0
      %v439 = vadd.f32 0.0, %v438
      %v440 = vpop.f32.mrf.mxu0
      %v441 = vpop.f32.mrf.mxu0
      %v442 = vadd.f32 0.0, %v441
      %v443 = vpop.f32.mrf.mxu0
      %444 = vmatprep.mubr.bf16.mxu0 0
      %445 = vmatmul.mubr.bf16.gmra.mxu0 %v355
      %v446 = vpop.f32.mrf.mxu0
      %v447 = vadd.f32 0.0, %v446
      %v448 = vpop.f32.mrf.mxu0
      %v449 = vpop.f32.mrf.mxu0
      %v450 = vadd.f32 0.0, %v449
      %v451 = vpop.f32.mrf.mxu0
      %452 = vmatprep.mubr.bf16.mxu0 0
      %453 = vmatmul.mubr.bf16.gmra.mxu0 %v358
      %v454 = vpop.f32.mrf.mxu0
      %v455 = vadd.f32 0.0, %v454
      %v456 = vpop.f32.mrf.mxu0
      %v457 = vpop.f32.mrf.mxu0
      %v458 = vadd.f32 0.0, %v457
      %v459 = vpop.f32.mrf.mxu0
      %460 = vmatprep.mubr.bf16.mxu0 0
      %461 = vmatmul.mubr.bf16.gmra.mxu0 %v361
      %v462 = vpop.f32.mrf.mxu0
      %v463 = vadd.f32 0.0, %v462
      %v464 = vpop.f32.mrf.mxu0
      %v465 = vpop.f32.mrf.mxu0
      %v466 = vadd.f32 0.0, %v465
      %v467 = vpop.f32.mrf.mxu0
      %468 = vmatprep.mubr.bf16.mxu0 0
      %469 = vmatmul.mubr.bf16.gmra.mxu0 %v364
      %v470 = vpop.f32.mrf.mxu0
      %v471 = vadd.f32 0.0, %v470
      %v472 = vpop.f32.mrf.mxu0
      %v473 = vpop.f32.mrf.mxu0
      %v474 = vadd.f32 0.0, %v473
      %v475 = vpop.f32.mrf.mxu0
      %476 = vmatprep.mubr.bf16.mxu0 0
      %477 = vmatmul.mubr.bf16.gmra.mxu0 %v367
      %v478 = vpop.f32.mrf.mxu0
      %v479 = vadd.f32 0.0, %v478
      %v480 = vpop.f32.mrf.mxu0
      %v481 = vpop.f32.mrf.mxu0
      %v482 = vadd.f32 0.0, %v481
      %v483 = vpop.f32.mrf.mxu0
      %484 = vmatprep.mubr.bf16.mxu0 0
      %485 = vmatmul.mubr.bf16.gmra.mxu0 %v370
      %v486 = vpop.f32.mrf.mxu0
      %v487 = vadd.f32 0.0, %v486
      %v488 = vpop.f32.mrf.mxu0
      %v489 = vpop.f32.mrf.mxu0
      %v490 = vadd.f32 0.0, %v489
      %v491 = vpop.f32.mrf.mxu0
      %492 = vdwg.mxu0
      %v493 = vpack.c.bf16 %v434, %v431
      %v494 = vpack.c.bf16 %v442, %v439
      %v495 = vpack.c.bf16 %v450, %v447
      %v496 = vpack.c.bf16 %v458, %v455
      %v497 = vpack.c.bf16 %v466, %v463
      %v498 = vpack.c.bf16 %v474, %v471
      %v499 = vpack.c.bf16 %v482, %v479
      %v500 = vpack.c.bf16 %v490, %v487
      %v509 = vunpack.c.l.b16 %v493
      %v510 = vunpack.c.h.b16 %v493
      %v511 = vunpack.c.l.b16 %v494
      %v512 = vunpack.c.h.b16 %v494
      %v513 = vunpack.c.l.b16 %v495
      %v514 = vunpack.c.h.b16 %v495
      %v515 = vunpack.c.l.b16 %v496
      %v516 = vunpack.c.h.b16 %v496
      %v517 = vunpack.c.l.b16 %v497
      %v518 = vunpack.c.h.b16 %v497
      %v519 = vunpack.c.l.b16 %v498
      %v520 = vunpack.c.h.b16 %v498
      %v521 = vunpack.c.l.b16 %v499
      %v522 = vunpack.c.h.b16 %v499
      %v523 = vunpack.c.l.b16 %v500
      %v524 = vunpack.c.h.b16 %v500
      %v525 = vpack.c.b16 %v509, %v509
      %v526 = vpack.c.b16 %v510, %v510
      %v527 = vpack.c.b16 %v511, %v511
      %v528 = vpack.c.b16 %v512, %v512
      %v529 = vpack.c.b16 %v513, %v513
      %v530 = vpack.c.b16 %v514, %v514
      %v531 = vpack.c.b16 %v515, %v515
      %v532 = vpack.c.b16 %v516, %v516
      %v533 = vpack.c.b16 %v517, %v517
      %v534 = vpack.c.b16 %v518, %v518
      %v535 = vpack.c.b16 %v519, %v519
      %v536 = vpack.c.b16 %v520, %v520
      %v537 = vpack.c.b16 %v521, %v521
      %v538 = vpack.c.b16 %v522, %v522
      %v539 = vpack.c.b16 %v523, %v523
      %v540 = vpack.c.b16 %v524, %v524
      %vm557 = vcmask 519168
      %558 = vst.msk [vmem:[%s222] sm:$0xf] %vm557, %v525
      %559 = vst.msk [vmem:[%s222 + $0x4] sm:$0xf] %vm557, %v526
      %560 = vst.msk [vmem:[%s222 + $0x8] sm:$0xf] %vm557, %v527
      %561 = vst.msk [vmem:[%s222 + $0xc] sm:$0xf] %vm557, %v528
      %562 = vst.msk [vmem:[%s222 + $0x10] sm:$0xf] %vm557, %v529
      %563 = vst.msk [vmem:[%s222 + $0x14] sm:$0xf] %vm557, %v530
      %564 = vst.msk [vmem:[%s222 + $0x18] sm:$0xf] %vm557, %v531
      %565 = vst.msk [vmem:[%s222 + $0x1c] sm:$0xf] %vm557, %v532
      %566 = vst.msk [vmem:[%s222 + $0x20] sm:$0xf] %vm557, %v533
      %567 = vst.msk [vmem:[%s222 + $0x24] sm:$0xf] %vm557, %v534
      %568 = vst.msk [vmem:[%s222 + $0x28] sm:$0xf] %vm557, %v535
      %569 = vst.msk [vmem:[%s222 + $0x2c] sm:$0xf] %vm557, %v536
      %570 = vst.msk [vmem:[%s222 + $0x30] sm:$0xf] %vm557, %v537
      %571 = vst.msk [vmem:[%s222 + $0x34] sm:$0xf] %vm557, %v538
      %572 = vst.msk [vmem:[%s222 + $0x38] sm:$0xf] %vm557, %v539
      %573 = vst.msk [vmem:[%s222 + $0x3c] sm:$0xf] %vm557, %v540
      %574 = vrot.lane.b32.xlu0 %v525, 64
      %v575 = vpop.permute.xlu0 %574
      %576 = vrot.lane.b32.xlu0 %v526, 64
      %v577 = vpop.permute.xlu0 %576
      %578 = vrot.lane.b32.xlu0 %v527, 64
      %v579 = vpop.permute.xlu0 %578
      %580 = vrot.lane.b32.xlu0 %v528, 64
      %v581 = vpop.permute.xlu0 %580
      %582 = vrot.lane.b32.xlu0 %v529, 64
      %v583 = vpop.permute.xlu0 %582
      %584 = vrot.lane.b32.xlu0 %v530, 64
      %v585 = vpop.permute.xlu0 %584
      %586 = vrot.lane.b32.xlu0 %v531, 64
      %v587 = vpop.permute.xlu0 %586
      %588 = vrot.lane.b32.xlu0 %v532, 64
      %v589 = vpop.permute.xlu0 %588
      %590 = vrot.lane.b32.xlu0 %v533, 64
      %v591 = vpop.permute.xlu0 %590
      %592 = vrot.lane.b32.xlu0 %v534, 64
      %v593 = vpop.permute.xlu0 %592
      %594 = vrot.lane.b32.xlu0 %v535, 64
      %v595 = vpop.permute.xlu0 %594
      %596 = vrot.lane.b32.xlu0 %v536, 64
      %v597 = vpop.permute.xlu0 %596
      %598 = vrot.lane.b32.xlu0 %v537, 64
      %v599 = vpop.permute.xlu0 %598
      %600 = vrot.lane.b32.xlu0 %v538, 64
      %v601 = vpop.permute.xlu0 %600
      %602 = vrot.lane.b32.xlu0 %v539, 64
      %v603 = vpop.permute.xlu0 %602
      %604 = vrot.lane.b32.xlu0 %v540, 64
      %v605 = vpop.permute.xlu0 %604
      %622 = vst.msk [vmem:[%s232] sm:$0xf] %vm557, %v575
      %623 = vst.msk [vmem:[%s232 + $0x4] sm:$0xf] %vm557, %v577
      %624 = vst.msk [vmem:[%s232 + $0x8] sm:$0xf] %vm557, %v579
      %625 = vst.msk [vmem:[%s232 + $0xc] sm:$0xf] %vm557, %v581
      %626 = vst.msk [vmem:[%s232 + $0x10] sm:$0xf] %vm557, %v583
      %627 = vst.msk [vmem:[%s232 + $0x14] sm:$0xf] %vm557, %v585
      %628 = vst.msk [vmem:[%s232 + $0x18] sm:$0xf] %vm557, %v587
      %629 = vst.msk [vmem:[%s232 + $0x1c] sm:$0xf] %vm557, %v589
      %630 = vst.msk [vmem:[%s232 + $0x20] sm:$0xf] %vm557, %v591
      %631 = vst.msk [vmem:[%s232 + $0x24] sm:$0xf] %vm557, %v593
      %632 = vst.msk [vmem:[%s232 + $0x28] sm:$0xf] %vm557, %v595
      %633 = vst.msk [vmem:[%s232 + $0x2c] sm:$0xf] %vm557, %v597
      %634 = vst.msk [vmem:[%s232 + $0x30] sm:$0xf] %vm557, %v599
      %635 = vst.msk [vmem:[%s232 + $0x34] sm:$0xf] %vm557, %v601
      %636 = vst.msk [vmem:[%s232 + $0x38] sm:$0xf] %vm557, %v603
      %637 = vst.msk [vmem:[%s232 + $0x3c] sm:$0xf] %vm557, %v605
      %s638 = smul.u32 16, %s20
      %p639 = scmp.lt.s32.totalorder %s19, 1
      %s640 = scalar_select %p639, %s19, 1
      %p641 = scmp.lt.s32.totalorder %s638, 31
      %s642 = scalar_select %p641, %s638, 31
      %s643 = smul.addr %s640, 32
      %s644 = sadd.s32 %s642, %s643
      %s645 = smul.addr %s644, 4
      %s646 = scalar_lea.vmem %s2, %s645
      %s647 = smul.u32 16, %s20
      %p648 = scmp.lt.s32.totalorder %s19, 1
      %s649 = scalar_select %p648, %s19, 1
      %p650 = scmp.lt.s32.totalorder %s647, 31
      %s651 = scalar_select %p650, %s647, 31
      %s652 = smul.addr %s649, 32
      %s653 = sadd.s32 %s651, %s652
      %s654 = smul.addr %s653, 4
      %s655 = scalar_lea.vmem %s3, %s654
      // Predicated region
      $region29: #{cross_attention_pallas.2} parent=27 // pred_check
        %p656 = pneg %p96
      $region30: #{cross_attention_pallas.2} parent=27 // pred_check_branch
        %658 = sbr.rel (%p656) target = $region32
      $region31: #{cross_attention_pallas.2} parent=27 // pred_region
        %s659 = smul.u32 16, %s20
      $region32: #{cross_attention_pallas.2} parent=27 // pred_fallthru
        _
      // Predicated region
      $region33: #{cross_attention_pallas.2} parent=27 // pred_check
        %p660 = pneg %p124
      $region34: #{cross_attention_pallas.2} parent=27 // pred_check_branch
        %662 = sbr.rel (%p660) target = $region36
      $region35: #{cross_attention_pallas.2} parent=27 // pred_region
        %s663 = smul.u32 16, %s20
      $region36: #{cross_attention_pallas.2} parent=27 // pred_fallthru
        _
    $region28: #{cross_attention_pallas.2} parent=5 // pred_fallthru
      _
    %p664 = scmp.le.s32.totalorder 2, %s10
    // Predicated region
    $region37: #{cross_attention_pallas.2} parent=5 // pred_check
      %p665 = pneg %p664
    $region38: #{cross_attention_pallas.2} parent=5 // pred_check_branch
      %667 = sbr.rel (%p665) target = $region40
    $region39: #{cross_attention_pallas.2} parent=5 // pred_region
      %s668 = ssub.s32 %s10, 2
      // Predicated region
      $region41: #{cross_attention_pallas.2} parent=39 // pred_check
        %p669 = pneg %p102
      $region42: #{cross_attention_pallas.2} parent=39 // pred_check_branch
        %671 = sbr.rel (%p669) target = $region44
      $region43: #{cross_attention_pallas.2} parent=39 // pred_region
        %s672 = smul.u32 16, %s22
        %p673 = scmp.lt.s32.totalorder %s21, 1
        %s674 = scalar_select %p673, %s21, 1
        %p675 = scmp.lt.s32.totalorder %s672, 31
        %s676 = scalar_select %p675, %s672, 31
        %s677 = smul.addr %s674, 32
        %s678 = sadd.s32 %s676, %s677
        %s679 = smul.addr %s678, 4
        %s680 = scalar_lea.vmem %s2, %s679
      $region44: #{cross_attention_pallas.2} parent=39 // pred_fallthru
        _
      // Predicated region
      $region45: #{cross_attention_pallas.2} parent=39 // pred_check
        %p681 = pneg %p130
      $region46: #{cross_attention_pallas.2} parent=39 // pred_check_branch
        %683 = sbr.rel (%p681) target = $region48
      $region47: #{cross_attention_pallas.2} parent=39 // pred_region
        %s684 = smul.u32 16, %s22
        %p685 = scmp.lt.s32.totalorder %s21, 1
        %s686 = scalar_select %p685, %s21, 1
        %p687 = scmp.lt.s32.totalorder %s684, 31
        %s688 = scalar_select %p687, %s684, 31
        %s689 = smul.addr %s686, 32
        %s690 = sadd.s32 %s688, %s689
        %s691 = smul.addr %s690, 4
        %s692 = scalar_lea.vmem %s3, %s691
      $region48: #{cross_attention_pallas.2} parent=39 // pred_fallthru
        _
    $region40: #{cross_attention_pallas.2} parent=5 // pred_fallthru
      _
  $region6: #{cross_attention_pallas.2} parent=0 // loop_footer
    %s14 = sadd.s32 1, %s10
  $region7: #{cross_attention_pallas.2} parent=0 // loop_footer_branch
    %9 = sbr.rel target = $region3
  $region8: #{cross_attention_pallas.2} parent=0 // loop_exit
    _

// kernel: cross_attention_pallas.3
$region0: #{cross_attention_pallas.3}
  #allocation0 [shape = 'u32[]', space=smem, size = 0x4, offset = 0x4, fixed_abs, tag = 'smem constant byte address 0x4 - core index']
  #allocation1 [shape = 'u32[144,128]{1,0:T(1,128)}', space=vmem, size = 0x12000, scoped, tag = 'internal scratch']
  %s0 = inlined_call_operand.vmem [shape: bf16[2,256,32], index: 0, kind: input, shape index: {}]
  %s1 = inlined_call_operand.vmem [shape: bf16[2,256,64], index: 1, kind: input, shape index: {}]
  %s2 = inlined_call_operand.vmem [shape: bf16[2,256,64], index: 2, kind: input, shape index: {}]
  %s3 = inlined_call_operand.vmem [shape: bf16[64,32], index: 3, kind: input, shape index: {}]
  %s4 = inlined_call_operand.vmem [shape: bf16[64,64], index: 4, kind: input, shape index: {}]
  %s5 = inlined_call_operand.vmem [shape: f32[64,1], index: 5, kind: input, shape index: {}]
  %s6 = inlined_call_operand.vmem [shape: f32[2,64,256], index: 6, kind: output, shape index: {0}]
  %s7 = inlined_call_operand.hbm [shape: bf16[2,256,256], index: 7, kind: output, shape index: {1}]
  %8 = xla_tuple %s6, %s7
  %s9 = sld [smem:[#allocation0]]
  $region99: #{cross_attention_pallas.3} parent=0
    _
  %s11 = ssub.s32 1, %s9
  %s12 = scalar_select 0, %s11, %s9
  $region1: #{cross_attention_pallas.3} parent=0
    #allocation2 [shape = 'u8[65536]{0}', space=vmem, size = 0x10000, scoped, tag = 'output window, operand 0']
    #allocation3 [shape = 'u8[131072]{0}', space=vmem, size = 0x20000, scoped, tag = 'output window, operand 1']
    #allocation4 [shape = 's32[2]{0}', space=sflag, size = 0x8, scoped, tag = 'scoped memory for cross_attention_pallas.3']
    %13 = vsyncpa [#allocation4], 0
    %s14 = scalar_lea.sflag [#allocation4], 1
    %15 = vsyncpa %s14, 0
    loop: start=0, step=1, limit=6
    $region2: #{cross_attention_pallas.3} parent=1 // loop_pre_header
      _
    $region3: #{cross_attention_pallas.3} parent=1 // loop_header
      %s17 = sphi 0, %s21
      %p18 = scmp.ge.s32.totalorder %s17, 6
      %s24 = sphi 0, %s36
      %s25 = sphi 0, %s32
      %s26 = sphi 0, %s24
      %s27 = sphi 0, %s25
      %s28 = sphi 0, %s26
      %s29 = sphi 0, %s27
      %s41 = sphi 0, %s43
      %s44 = sphi 0, %s41
      %s45 = sphi 0, %s44
      %s61 = sphi 0, %s45
      %s67 = sphi 0, %s69
      %s70 = sphi 0, %s67
      %s71 = sphi 0, %s70
      %s87 = sphi 0, %s71
      %s93 = sphi 0, %s95
      %s96 = sphi 0, %s93
      %s97 = sphi 0, %s96
      %s113 = sphi 0, %s97
      %s117 = sphi 0, %s117
      %s119 = sphi 0, %s117
      %s120 = sphi 0, %s119
      %s134 = sphi 0, %s120
      %s138 = sphi 0, %s138
      %s140 = sphi 0, %s138
      %s141 = sphi 0, %s140
      %s155 = sphi 0, %s141
      %s159 = sphi 0, %s159
      %s161 = sphi 0, %s159
      %s162 = sphi 0, %s161
      %s176 = sphi 0, %s162
      %s184 = sphi 0, %s186
      %s187 = sphi 0, %s184
      %s188 = sphi 0, %s187
      %s204 = sphi 0, %s188
      %s212 = sphi 0, %s214
      %s215 = sphi 0, %s212
      %s216 = sphi 0, %s215
      %s232 = sphi 0, %s216
    $region4: #{cross_attention_pallas.3} parent=1 // loop_header_branch
      %20 = sbr.rel (%p18) target = $region8
    $region5: #{cross_attention_pallas.3} parent=1 // loop_body
      %s22 = ssub.s32 %s17, 1
      %s23 = ssub.s32 %s17, 2
      %s30 = sadd.s32 1, %s25
      %p31 = scmp.ge.s32.totalorder %s30, 2
      %s32 = scalar_select %p31, 0, %s30
      %s33 = sadd.s32 1, %s24
      %s34 = scalar_select %p31, %s33, %s24
      %p35 = scmp.ge.s32.totalorder %s34, 2
      %s36 = scalar_select %p35, 0, %s34
      %s37 = ssub.s32 %s24, %s36
      %s38 = ssub.s32 %s25, %s32
      %s39 = sor.u32 %s37, %s38
      %p40 = scmp.eq.s32.totalorder %s39, 0
      %s42 = sadd.s32 %s41, 1
      %s43 = scalar_select %p40, %s41, %s42
      %p46 = pneg %p40
      %p47 = scmp.eq.s32.totalorder %s17, 3
      %p48 = por %p46, %p47
      %p49 = scmp.ne.s32.totalorder %s41, %s44
      %p50 = scmp.eq.s32.totalorder %s17, 0
      %p51 = por %p49, %p50
      %p52 = scmp.ne.s32.totalorder %s41, %s44
      %p53 = scmp.eq.s32.totalorder %s22, 3
      %p54 = por %p52, %p53
      %p55 = scmp.ne.s32.totalorder %s44, %s45
      %p56 = scmp.eq.s32.totalorder %s22, 0
      %p57 = por %p55, %p56
      %p58 = scmp.ne.s32.totalorder %s44, %s45
      %p59 = scmp.eq.s32.totalorder %s23, 3
      %p60 = por %p58, %p59
      %p62 = scmp.ne.s32.totalorder %s45, %s61
      %p63 = scmp.eq.s32.totalorder %s23, 0
      %p64 = por %p62, %p63
      %s65 = ssub.s32 %s24, %s36
      %p66 = scmp.eq.s32.totalorder %s65, 0
      %s68 = sadd.s32 %s67, 1
      %s69 = scalar_select %p66, %s67, %s68
      %p72 = pneg %p66
      %p73 = scmp.eq.s32.totalorder %s17, 3
      %p74 = por %p72, %p73
      %p75 = scmp.ne.s32.totalorder %s67, %s70
      %p76 = scmp.eq.s32.totalorder %s17, 0
      %p77 = por %p75, %p76
      %p78 = scmp.ne.s32.totalorder %s67, %s70
      %p79 = scmp.eq.s32.totalorder %s22, 3
      %p80 = por %p78, %p79
      %p81 = scmp.ne.s32.totalorder %s70, %s71
      %p82 = scmp.eq.s32.totalorder %s22, 0
      %p83 = por %p81, %p82
      %p84 = scmp.ne.s32.totalorder %s70, %s71
      %p85 = scmp.eq.s32.totalorder %s23, 3
      %p86 = por %p84, %p85
      %p88 = scmp.ne.s32.totalorder %s71, %s87
      %p89 = scmp.eq.s32.totalorder %s23, 0
      %p90 = por %p88, %p89
      %s91 = ssub.s32 %s24, %s36
      %p92 = scmp.eq.s32.totalorder %s91, 0
      %s94 = sadd.s32 %s93, 1
      %s95 = scalar_select %p92, %s93, %s94
      %p98 = pneg %p92
      %p99 = scmp.eq.s32.totalorder %s17, 3
      %p100 = por %p98, %p99
      %p101 = scmp.ne.s32.totalorder %s93, %s96
      %p102 = scmp.eq.s32.totalorder %s17, 0
      %p103 = por %p101, %p102
      %p104 = scmp.ne.s32.totalorder %s93, %s96
      %p105 = scmp.eq.s32.totalorder %s22, 3
      %p106 = por %p104, %p105
      %p107 = scmp.ne.s32.totalorder %s96, %s97
      %p108 = scmp.eq.s32.totalorder %s22, 0
      %p109 = por %p107, %p108
      %p110 = scmp.ne.s32.totalorder %s96, %s97
      %p111 = scmp.eq.s32.totalorder %s23, 3
      %p112 = por %p110, %p111
      %p114 = scmp.ne.s32.totalorder %s97, %s113
      %p115 = scmp.eq.s32.totalorder %s23, 0
      %p116 = por %p114, %p115
      %s118 = sadd.s32 %s117, 1
      %p121 = scmp.eq.s32.totalorder %s17, 3
      %p122 = scmp.ne.s32.totalorder %s117, %s119
      %p123 = scmp.eq.s32.totalorder %s17, 0
      %p124 = por %p122, %p123
      %p125 = scmp.ne.s32.totalorder %s117, %s119
      %p126 = scmp.eq.s32.totalorder %s22, 3
      %p127 = por %p125, %p126
      %p128 = scmp.ne.s32.totalorder %s119, %s120
      %p129 = scmp.eq.s32.totalorder %s22, 0
      %p130 = por %p128, %p129
      %p131 = scmp.ne.s32.totalorder %s119, %s120
      %p132 = scmp.eq.s32.totalorder %s23, 3
      %p133 = por %p131, %p132
      %p135 = scmp.ne.s32.totalorder %s120, %s134
      %p136 = scmp.eq.s32.totalorder %s23, 0
      %p137 = por %p135, %p136
      %s139 = sadd.s32 %s138, 1
      %p142 = scmp.eq.s32.totalorder %s17, 3
      %p143 = scmp.ne.s32.totalorder %s138, %s140
      %p144 = scmp.eq.s32.totalorder %s17, 0
      %p145 = por %p143, %p144
      %p146 = scmp.ne.s32.totalorder %s138, %s140
      %p147 = scmp.eq.s32.totalorder %s22, 3
      %p148 = por %p146, %p147
      %p149 = scmp.ne.s32.totalorder %s140, %s141
      %p150 = scmp.eq.s32.totalorder %s22, 0
      %p151 = por %p149, %p150
      %p152 = scmp.ne.s32.totalorder %s140, %s141
      %p153 = scmp.eq.s32.totalorder %s23, 3
      %p154 = por %p152, %p153
      %p156 = scmp.ne.s32.totalorder %s141, %s155
      %p157 = scmp.eq.s32.totalorder %s23, 0
      %p158 = por %p156, %p157
      %s160 = sadd.s32 %s159, 1
      %p163 = scmp.eq.s32.totalorder %s17, 3
      %p164 = scmp.ne.s32.totalorder %s159, %s161
      %p165 = scmp.eq.s32.totalorder %s17, 0
      %p166 = por %p164, %p165
      %p167 = scmp.ne.s32.totalorder %s159, %s161
      %p168 = scmp.eq.s32.totalorder %s22, 3
      %p169 = por %p167, %p168
      %p170 = scmp.ne.s32.totalorder %s161, %s162
      %p171 = scmp.eq.s32.totalorder %s22, 0
      %p172 = por %p170, %p171
      %p173 = scmp.ne.s32.totalorder %s161, %s162
      %p174 = scmp.eq.s32.totalorder %s23, 3
      %p175 = por %p173, %p174
      %p177 = scmp.ne.s32.totalorder %s162, %s176
      %p178 = scmp.eq.s32.totalorder %s23, 0
      %p179 = por %p177, %p178
      %s180 = ssub.s32 %s24, %s36
      %s181 = ssub.s32 %s25, %s32
      %s182 = sor.u32 %s180, %s181
      %p183 = scmp.eq.s32.totalorder %s182, 0
      %s185 = sadd.s32 %s184, 1
      %s186 = scalar_select %p183, %s184, %s185
      %p189 = pneg %p183
      %p190 = scmp.eq.s32.totalorder %s17, 3
      %p191 = por %p189, %p190
      %p192 = scmp.ne.s32.totalorder %s184, %s187
      %p193 = scmp.eq.s32.totalorder %s17, 0
      %p194 = por %p192, %p193
      %p195 = scmp.ne.s32.totalorder %s184, %s187
      %p196 = scmp.eq.s32.totalorder %s22, 3
      %p197 = por %p195, %p196
      %p198 = scmp.ne.s32.totalorder %s187, %s188
      %p199 = scmp.eq.s32.totalorder %s22, 0
      %p200 = por %p198, %p199
      %p201 = scmp.ne.s32.totalorder %s187, %s188
      %p202 = scmp.eq.s32.totalorder %s23, 3
      %p203 = por %p201, %p202
      %p205 = scmp.ne.s32.totalorder %s188, %s204
      %p206 = scmp.eq.s32.totalorder %s23, 0
      %p207 = por %p205, %p206
      %s208 = ssub.s32 %s24, %s36
      %s209 = ssub.s32 %s25, %s32
      %s210 = sor.u32 %s208, %s209
      %p211 = scmp.eq.s32.totalorder %s210, 0
      %s213 = sadd.s32 %s212, 1
      %s214 = scalar_select %p211, %s212, %s213
      %p217 = pneg %p211
      %p218 = scmp.eq.s32.totalorder %s17, 3
      %p219 = por %p217, %p218
      %p220 = scmp.ne.s32.totalorder %s212, %s215
      %p221 = scmp.eq.s32.totalorder %s17, 0
      %p222 = por %p220, %p221
      %p223 = scmp.ne.s32.totalorder %s212, %s215
      %p224 = scmp.eq.s32.totalorder %s22, 3
      %p225 = por %p223, %p224
      %p226 = scmp.ne.s32.totalorder %s215, %s216
      %p227 = scmp.eq.s32.totalorder %s22, 0
      %p228 = por %p226, %p227
      %p229 = scmp.ne.s32.totalorder %s215, %s216
      %p230 = scmp.eq.s32.totalorder %s23, 3
      %p231 = por %p229, %p230
      %p233 = scmp.ne.s32.totalorder %s216, %s232
      %p234 = scmp.eq.s32.totalorder %s23, 0
      %p235 = por %p233, %p234
      %p236 = scmp.le.s32.totalorder 1, %s17
      %p237 = scmp.lt.s32.totalorder %s17, 5
      %p238 = pnand %p236, %p237
      %p239 = pneg %p238
      // Predicated region
      $region9: #{cross_attention_pallas.3} parent=5 // pred_check
        _
      $region10: #{cross_attention_pallas.3} parent=5 // pred_check_branch
        %241 = sbr.rel (%p238) target = $region12
      $region11: #{cross_attention_pallas.3} parent=5 // pred_region
        %s242 = ssub.s32 %s17, 1
        // Predicated region
        $region13: #{cross_attention_pallas.3} parent=11 // pred_check
          %p243 = pneg %p130
        $region14: #{cross_attention_pallas.3} parent=11 // pred_check_branch
          %245 = sbr.rel (%p243) target = $region16
        $region15: #{cross_attention_pallas.3} parent=11 // pred_region
          _
        $region16: #{cross_attention_pallas.3} parent=11 // pred_fallthru
          _
        // Predicated region
        $region17: #{cross_attention_pallas.3} parent=11 // pred_check
          %p246 = pneg %p151
        $region18: #{cross_attention_pallas.3} parent=11 // pred_check_branch
          %248 = sbr.rel (%p246) target = $region20
        $region19: #{cross_attention_pallas.3} parent=11 // pred_region
          _
        $region20: #{cross_attention_pallas.3} parent=11 // pred_fallthru
          _
        // Predicated region
        $region21: #{cross_attention_pallas.3} parent=11 // pred_check
          %p249 = pneg %p172
        $region22: #{cross_attention_pallas.3} parent=11 // pred_check_branch
          %251 = sbr.rel (%p249) target = $region24
        $region23: #{cross_attention_pallas.3} parent=11 // pred_region
          _
        $region24: #{cross_attention_pallas.3} parent=11 // pred_fallthru
          _
      $region12: #{cross_attention_pallas.3} parent=5 // pred_fallthru
        _
      %p252 = scmp.lt.s32.totalorder %s17, 4
      // Predicated region
      $region25: #{cross_attention_pallas.3} parent=5 // pred_check
        %p253 = pneg %p252
      $region26: #{cross_attention_pallas.3} parent=5 // pred_check_branch
        %255 = sbr.rel (%p253) target = $region28
      $region27: #{cross_attention_pallas.3} parent=5 // pred_region
        // Predicated region
        $region29: #{cross_attention_pallas.3} parent=27 // pred_check
          %p256 = pneg %p51
        $region30: #{cross_attention_pallas.3} parent=27 // pred_check_branch
          %258 = sbr.rel (%p256) target = $region32
        $region31: #{cross_attention_pallas.3} parent=27 // pred_region
          %s259 = smul.u32 16, %s25
          %p260 = scmp.lt.s32.totalorder %s24, 1
          %s261 = scalar_select %p260, %s24, 1
          %p262 = scmp.lt.s32.totalorder %s259, 31
          %s263 = scalar_select %p262, %s259, 31
          %s264 = smul.addr %s261, 32
          %s265 = sadd.s32 %s263, %s264
          %s266 = smul.addr %s265, 4
          %s267 = scalar_lea.vmem %s0, %s266
          %s268 = smul.u32 16, %s25
        $region32: #{cross_attention_pallas.3} parent=27 // pred_fallthru
          _
        // Predicated region
        $region33: #{cross_attention_pallas.3} parent=27 // pred_check
          %p269 = pneg %p77
        $region34: #{cross_attention_pallas.3} parent=27 // pred_check_branch
          %271 = sbr.rel (%p269) target = $region36
        $region35: #{cross_attention_pallas.3} parent=27 // pred_region
          %p272 = scmp.lt.s32.totalorder %s24, 1
          %s273 = scalar_select %p272, %s24, 1
          %s274 = smul.addr %s273, 32
          %s275 = smul.addr %s274, 4
          %s276 = scalar_lea.vmem %s1, %s275
        $region36: #{cross_attention_pallas.3} parent=27 // pred_fallthru
          _
        // Predicated region
        $region37: #{cross_attention_pallas.3} parent=27 // pred_check
          %p277 = pneg %p103
        $region38: #{cross_attention_pallas.3} parent=27 // pred_check_branch
          %279 = sbr.rel (%p277) target = $region40
        $region39: #{cross_attention_pallas.3} parent=27 // pred_region
          %p280 = scmp.lt.s32.totalorder %s24, 1
          %s281 = scalar_select %p280, %s24, 1
          %s282 = smul.addr %s281, 32
          %s283 = smul.addr %s282, 4
          %s284 = scalar_lea.vmem %s2, %s283
        $region40: #{cross_attention_pallas.3} parent=27 // pred_fallthru
          _
      $region28: #{cross_attention_pallas.3} parent=5 // pred_fallthru
        _
      %p285 = scmp.le.s32.totalorder 1, %s17
      %p286 = scmp.lt.s32.totalorder %s17, 5
      %p287 = pnand %p285, %p286
      %p288 = pneg %p287
      // Predicated region
      $region41: #{cross_attention_pallas.3} parent=5 // pred_check
        _
      $region42: #{cross_attention_pallas.3} parent=5 // pred_check_branch
        %290 = sbr.rel (%p287) target = $region44
      $region43: #{cross_attention_pallas.3} parent=5 // pred_region
        %s291 = ssub.s32 %s17, 1
        %s292 = smul.u32 16, %s27
        %p293 = scmp.lt.s32.totalorder %s26, 1
        %s294 = scalar_select %p293, %s26, 1
        %p295 = scmp.lt.s32.totalorder %s292, 31
        %s296 = scalar_select %p295, %s292, 31
        %s297 = smul.addr %s294, 32
        %s298 = sadd.s32 %s296, %s297
        %s299 = smul.addr %s298, 4
        %s300 = scalar_lea.vmem %s0, %s299
        %p301 = pneg %p57
        %p302 = pneg %p54
        %p303 = scmp.lt.s32.totalorder %s26, 1
        %s304 = scalar_select %p303, %s26, 1
        %s305 = smul.addr %s304, 32
        %s306 = smul.addr %s305, 4
        %s307 = scalar_lea.vmem %s1, %s306
        %p308 = pneg %p83
        %p309 = pneg %p80
        %p310 = scmp.lt.s32.totalorder %s26, 1
        %s311 = scalar_select %p310, %s26, 1
        %s312 = smul.addr %s311, 32
        %s313 = smul.addr %s312, 4
        %s314 = scalar_lea.vmem %s2, %s313
        %p315 = pneg %p109
        %p316 = pneg %p106
        %p317 = pneg %p130
        %p318 = pneg %p127
        %p319 = pneg %p151
        %p320 = pneg %p148
        %p321 = pneg %p172
        %p322 = pneg %p169
        %p323 = pneg %p200
        %p324 = pneg %p197
        %s325 = sand.u32 %s187, 1
        %s326 = sand.u32 %s187, 1
        %s327 = smul.addr %s326, 64
        %s328 = scalar_lea.vmem [#allocation2], %s327
        %p329 = pneg %p228
        %p330 = pneg %p225
        %s331 = sand.u32 %s215, 1
        %s332 = scalar_lea.sflag [#allocation4], %s331
        %s333 = sand.u32 %s215, 1
        %s334 = smul.addr %s333, 128
        %s335 = scalar_lea.vmem [#allocation3], %s334
        %s336 = smul.u32 16, %s27
        %p337 = scmp.lt.s32.totalorder %s26, 1
        %s338 = scalar_select %p337, %s26, 1
        %p339 = scmp.lt.s32.totalorder %s336, 31
        %s340 = scalar_select %p339, %s336, 31
        %s341 = smul.addr %s338, 32
        %s342 = sadd.s32 %s340, %s341
        %s343 = smul.addr %s342, 4
        %s344 = scalar_lea.vmem %s0, %s343
        %s345 = smul.u32 16, %s27
        %p346 = scmp.lt.s32.totalorder %s26, 1
        %s347 = scalar_select %p346, %s26, 1
        %s348 = smul.addr %s347, 32
        %s349 = smul.addr %s348, 4
        %s350 = scalar_lea.vmem %s1, %s349
        %p351 = scmp.lt.s32.totalorder %s26, 1
        %s352 = scalar_select %p351, %s26, 1
        %s353 = smul.addr %s352, 32
        %s354 = smul.addr %s353, 4
        %s355 = scalar_lea.vmem %s2, %s354
        %s356 = smul.u32 16, %s27
        %v358 = vld [vmem:[%s344] sm:$0xf]
        %v359 = vld [vmem:[%s344 + $0x4] sm:$0xf]
        %v360 = vld [vmem:[%s344 + $0x8] sm:$0xf]
        %v361 = vld [vmem:[%s344 + $0xc] sm:$0xf]
        %v362 = vld [vmem:[%s344 + $0x10] sm:$0xf]
        %v363 = vld [vmem:[%s344 + $0x14] sm:$0xf]
        %v364 = vld [vmem:[%s344 + $0x18] sm:$0xf]
        %v365 = vld [vmem:[%s344 + $0x1c] sm:$0xf]
        %v366 = vld [vmem:[%s344 + $0x20] sm:$0xf]
        %v367 = vld [vmem:[%s344 + $0x24] sm:$0xf]
        %v368 = vld [vmem:[%s344 + $0x28] sm:$0xf]
        %v369 = vld [vmem:[%s344 + $0x2c] sm:$0xf]
        %v370 = vld [vmem:[%s344 + $0x30] sm:$0xf]
        %v371 = vld [vmem:[%s344 + $0x34] sm:$0xf]
        %v372 = vld [vmem:[%s344 + $0x38] sm:$0xf]
        %v373 = vld [vmem:[%s344 + $0x3c] sm:$0xf]
        %v374 = vld [vmem:[%s3] sm:$0xf]
        %v375 = vld [vmem:[%s3 + $0x4] sm:$0xf]
        %v376 = vld [vmem:[%s3 + $0x8] sm:$0xf]
        %v377 = vld [vmem:[%s3 + $0xc] sm:$0xf]
        %v378 = vld [vmem:[%s3 + $0x10] sm:$0xf]
        %v379 = vld [vmem:[%s3 + $0x14] sm:$0xf]
        %v380 = vld [vmem:[%s3 + $0x18] sm:$0xf]
        %v381 = vld [vmem:[%s3 + $0x1c] sm:$0xf]
        %v398 = vunpack.c.l.b16 %v358
        %v399 = vunpack.c.l.b16 %v359
        %v400 = vunpack.c.l.b16 %v360
        %v401 = vunpack.c.l.b16 %v361
        %v402 = vunpack.c.l.b16 %v362
        %v403 = vunpack.c.l.b16 %v363
        %v404 = vunpack.c.l.b16 %v364
        %v405 = vunpack.c.l.b16 %v365
        %v406 = vunpack.c.l.b16 %v366
        %v407 = vunpack.c.l.b16 %v367
        %v408 = vunpack.c.l.b16 %v368
        %v409 = vunpack.c.l.b16 %v369
        %v410 = vunpack.c.l.b16 %v370
        %v411 = vunpack.c.l.b16 %v371
        %v412 = vunpack.c.l.b16 %v372
        %v413 = vunpack.c.l.b16 %v373
        %v414 = vpack.c.b16 %v399, %v398
        %v415 = vpack.c.b16 %v401, %v400
        %v416 = vpack.c.b16 %v403, %v402
        %v417 = vpack.c.b16 %v405, %v404
        %v418 = vpack.c.b16 %v407, %v406
        %v419 = vpack.c.b16 %v409, %v408
        %v420 = vpack.c.b16 %v411, %v410
        %v421 = vpack.c.b16 %v413, %v412
        %v430 = vunpack.c.l.b16 %v374
        %v431 = vunpack.c.l.b16 %v375
        %v432 = vunpack.c.l.b16 %v376
        %v433 = vunpack.c.l.b16 %v377
        %v434 = vunpack.c.l.b16 %v378
        %v435 = vunpack.c.l.b16 %v379
        %v436 = vunpack.c.l.b16 %v380
        %v437 = vunpack.c.l.b16 %v381
        %v438 = vpack.c.b16 %v431, %v430
        %v439 = vpack.c.b16 %v433, %v432
        %v440 = vpack.c.b16 %v435, %v434
        %v441 = vpack.c.b16 %v437, %v436
        %vm442 = vcmask 261120
        %v444 = vsel %vm442, %v414, 0
        %v447 = vsel %vm442, %v415, 0
        %v450 = vsel %vm442, %v416, 0
        %v453 = vsel %vm442, %v417, 0
        %v456 = vsel %vm442, %v418, 0
        %v459 = vsel %vm442, %v419, 0
        %v462 = vsel %vm442, %v420, 0
        %v465 = vsel %vm442, %v421, 0
        %v468 = vsel %vm442, %v438, 0
        %v471 = vsel %vm442, %v439, 0
        %v474 = vsel %vm442, %v440, 0
        %v477 = vsel %vm442, %v441, 0
        %479 = vmatprep.subr.bf16.mxu0 0
        %480 = vmatpush1.bf16.xpose.msra.mxu0 0
        %481 = vmatprep.subr.bf16.mxu0 0
        %482 = vmatpush1.bf16.xpose.msra.mxu0 0
        %483 = vmatprep.subr.bf16.mxu0 0
        %484 = vmatpush1.bf16.xpose.msra.mxu0 0
        %485 = vmatprep.subr.bf16.mxu0 0
        %486 = vmatpush1.bf16.xpose.msra.mxu0 0
        %487 = vmatprep.subr.bf16.mxu0 0
        %488 = vmatpush1.bf16.xpose.msra.mxu0 %v477
        %489 = vmatprep.subr.bf16.mxu0 0
        %490 = vmatpush1.bf16.xpose.msra.mxu0 %v474
        %491 = vmatprep.subr.bf16.mxu0 0
        %492 = vmatpush1.bf16.xpose.msra.mxu0 %v471
        %493 = vmatprep.subr.bf16.mxu0 0
        %494 = vmatpush1.bf16.xpose.msra.mxu0 %v468
        %495 = vmatprep.subr.bf16.mxu0 0
        %496 = vmatpush2.bf16.xpose.msra.mxu0 0
        %497 = vmatprep.subr.bf16.mxu0 0
        %498 = vmatpush2.bf16.xpose.msra.mxu0 0
        %499 = vmatprep.subr.bf16.mxu0 0
        %500 = vmatpush2.bf16.xpose.msra.mxu0 0
        %501 = vmatprep.subr.bf16.mxu0 0
        %502 = vmatpush2.bf16.xpose.msra.mxu0 0
        %503 = vmatprep.subr.bf16.mxu0 0
        %504 = vmatpush2.bf16.xpose.msra.mxu0 0
        %505 = vmatprep.subr.bf16.mxu0 0
        %506 = vmatpush2.bf16.xpose.msra.mxu0 0
        %507 = vmatprep.subr.bf16.mxu0 0
        %508 = vmatpush2.bf16.xpose.msra.mxu0 0
        %509 = vmatprep.subr.bf16.mxu0 0
        %510 = vmatpush2.bf16.xpose.msra.mxu0 0
        %511 = vmatprep.mubr.bf16.mxu0 0
        %512 = vmatmul.mubr.bf16.gmra.mxu0 %v444
        %v513 = vpop.f32.mrf.mxu0
        %v514 = vadd.f32 0.0, %v513
        %v515 = vpop.f32.mrf.mxu0
        %v516 = vpop.f32.mrf.mxu0
        %v517 = vadd.f32 0.0, %v516
        %v518 = vpop.f32.mrf.mxu0
        %519 = vmatprep.mubr.bf16.mxu0 0
        %520 = vmatmul.mubr.bf16.gmra.mxu0 %v447
        %v521 = vpop.f32.mrf.mxu0
        %v522 = vadd.f32 0.0, %v521
        %v523 = vpop.f32.mrf.mxu0
        %v524 = vpop.f32.mrf.mxu0
        %v525 = vadd.f32 0.0, %v524
        %v526 = vpop.f32.mrf.mxu0
        %527 = vmatprep.mubr.bf16.mxu0 0
        %528 = vmatmul.mubr.bf16.gmra.mxu0 %v450
        %v529 = vpop.f32.mrf.mxu0
        %v530 = vadd.f32 0.0, %v529
        %v531 = vpop.f32.mrf.mxu0
        %v532 = vpop.f32.mrf.mxu0
        %v533 = vadd.f32 0.0, %v532
        %v534 = vpop.f32.mrf.mxu0
        %535 = vmatprep.mubr.bf16.mxu0 0
        %536 = vmatmul.mubr.bf16.gmra.mxu0 %v453
        %v537 = vpop.f32.mrf.mxu0
        %v538 = vadd.f32 0.0, %v537
        %v539 = vpop.f32.mrf.mxu0
        %v540 = vpop.f32.mrf.mxu0
        %v541 = vadd.f32 0.0, %v540
        %v542 = vpop.f32.mrf.mxu0
        %543 = vmatprep.mubr.bf16.mxu0 0
        %544 = vmatmul.mubr.bf16.gmra.mxu0 %v456
        %v545 = vpop.f32.mrf.mxu0
        %v546 = vadd.f32 0.0, %v545
        %v547 = vpop.f32.mrf.mxu0
        %v548 = vpop.f32.mrf.mxu0
        %v549 = vadd.f32 0.0, %v548
        %v550 = vpop.f32.mrf.mxu0
        %551 = vmatprep.mubr.bf16.mxu0 0
        %552 = vmatmul.mubr.bf16.gmra.mxu0 %v459
        %v553 = vpop.f32.mrf.mxu0
        %v554 = vadd.f32 0.0, %v553
        %v555 = vpop.f32.mrf.mxu0
        %v556 = vpop.f32.mrf.mxu0
        %v557 = vadd.f32 0.0, %v556
        %v558 = vpop.f32.mrf.mxu0
        %559 = vmatprep.mubr.bf16.mxu0 0
        %560 = vmatmul.mubr.bf16.gmra.mxu0 %v462
        %v561 = vpop.f32.mrf.mxu0
        %v562 = vadd.f32 0.0, %v561
        %v563 = vpop.f32.mrf.mxu0
        %v564 = vpop.f32.mrf.mxu0
        %v565 = vadd.f32 0.0, %v564
        %v566 = vpop.f32.mrf.mxu0
        %567 = vmatprep.mubr.bf16.mxu0 0
        %568 = vmatmul.mubr.bf16.gmra.mxu0 %v465
        %v569 = vpop.f32.mrf.mxu0
        %v570 = vadd.f32 0.0, %v569
        %v571 = vpop.f32.mrf.mxu0
        %v572 = vpop.f32.mrf.mxu0
        %v573 = vadd.f32 0.0, %v572
        %v574 = vpop.f32.mrf.mxu0
        %575 = vdwg.mxu0
        %v576 = vpack.c.bf16 %v517, %v514
        %v577 = vpack.c.bf16 %v525, %v522
        %v578 = vpack.c.bf16 %v533, %v530
        %v579 = vpack.c.bf16 %v541, %v538
        %v580 = vpack.c.bf16 %v549, %v546
        %v581 = vpack.c.bf16 %v557, %v554
        %v582 = vpack.c.bf16 %v565, %v562
        %v583 = vpack.c.bf16 %v573, %v570
        %v584 = vld [vmem:[%s350] sm:$0xf]
        %v585 = vld [vmem:[%s350 + $0x4] sm:$0xf]
        %v586 = vld [vmem:[%s350 + $0x8] sm:$0xf]
        %v587 = vld [vmem:[%s350 + $0xc] sm:$0xf]
        %v588 = vld [vmem:[%s350 + $0x10] sm:$0xf]
        %v589 = vld [vmem:[%s350 + $0x14] sm:$0xf]
        %v590 = vld [vmem:[%s350 + $0x18] sm:$0xf]
        %v591 = vld [vmem:[%s350 + $0x1c] sm:$0xf]
        %v592 = vld [vmem:[%s350 + $0x20] sm:$0xf]
        %v593 = vld [vmem:[%s350 + $0x24] sm:$0xf]
        %v594 = vld [vmem:[%s350 + $0x28] sm:$0xf]
        %v595 = vld [vmem:[%s350 + $0x2c] sm:$0xf]
        %v596 = vld [vmem:[%s350 + $0x30] sm:$0xf]
        %v597 = vld [vmem:[%s350 + $0x34] sm:$0xf]
        %v598 = vld [vmem:[%s350 + $0x38] sm:$0xf]
        %v599 = vld [vmem:[%s350 + $0x3c] sm:$0xf]
        %v600 = vld [vmem:[%s350 + $0x40] sm:$0xf]
        %v601 = vld [vmem:[%s350 + $0x44] sm:$0xf]
        %v602 = vld [vmem:[%s350 + $0x48] sm:$0xf]
        %v603 = vld [vmem:[%s350 + $0x4c] sm:$0xf]
        %v604 = vld [vmem:[%s350 + $0x50] sm:$0xf]
        %v605 = vld [vmem:[%s350 + $0x54] sm:$0xf]
        %v606 = vld [vmem:[%s350 + $0x58] sm:$0xf]
        %v607 = vld [vmem:[%s350 + $0x5c] sm:$0xf]
        %v608 = vld [vmem:[%s350 + $0x60] sm:$0xf]
        %v609 = vld [vmem:[%s350 + $0x64] sm:$0xf]
        %v610 = vld [vmem:[%s350 + $0x68] sm:$0xf]
        %v611 = vld [vmem:[%s350 + $0x6c] sm:$0xf]
        %v612 = vld [vmem:[%s350 + $0x70] sm:$0xf]
        %v613 = vld [vmem:[%s350 + $0x74] sm:$0xf]
        %v614 = vld [vmem:[%s350 + $0x78] sm:$0xf]
        %v615 = vld [vmem:[%s350 + $0x7c] sm:$0xf]
        %v648 = vunpack.c.l.b16 %v584
        %v649 = vunpack.c.l.b16 %v585
        %v650 = vunpack.c.l.b16 %v586
        %v651 = vunpack.c.l.b16 %v587
        %v652 = vunpack.c.l.b16 %v588
        %v653 = vunpack.c.l.b16 %v589
        %v654 = vunpack.c.l.b16 %v590
        %v655 = vunpack.c.l.b16 %v591
        %v656 = vunpack.c.l.b16 %v592
        %v657 = vunpack.c.l.b16 %v593
        %v658 = vunpack.c.l.b16 %v594
        %v659 = vunpack.c.l.b16 %v595
        %v660 = vunpack.c.l.b16 %v596
        %v661 = vunpack.c.l.b16 %v597
        %v662 = vunpack.c.l.b16 %v598
        %v663 = vunpack.c.l.b16 %v599
        %v664 = vunpack.c.l.b16 %v600
        %v665 = vunpack.c.l.b16 %v601
        %v666 = vunpack.c.l.b16 %v602
        %v667 = vunpack.c.l.b16 %v603
        %v668 = vunpack.c.l.b16 %v604
        %v669 = vunpack.c.l.b16 %v605
        %v670 = vunpack.c.l.b16 %v606
        %v671 = vunpack.c.l.b16 %v607
        %v672 = vunpack.c.l.b16 %v608
        %v673 = vunpack.c.l.b16 %v609
        %v674 = vunpack.c.l.b16 %v610
        %v675 = vunpack.c.l.b16 %v611
        %v676 = vunpack.c.l.b16 %v612
        %v677 = vunpack.c.l.b16 %v613
        %v678 = vunpack.c.l.b16 %v614
        %v679 = vunpack.c.l.b16 %v615
        %v680 = vpack.c.b16 %v649, %v648
        %v681 = vpack.c.b16 %v651, %v650
        %v682 = vpack.c.b16 %v653, %v652
        %v683 = vpack.c.b16 %v655, %v654
        %v684 = vpack.c.b16 %v657, %v656
        %v685 = vpack.c.b16 %v659, %v658
        %v686 = vpack.c.b16 %v661, %v660
        %v687 = vpack.c.b16 %v663, %v662
        %v688 = vpack.c.b16 %v665, %v664
        %v689 = vpack.c.b16 %v667, %v666
        %v690 = vpack.c.b16 %v669, %v668
        %v691 = vpack.c.b16 %v671, %v670
        %v692 = vpack.c.b16 %v673, %v672
        %v693 = vpack.c.b16 %v675, %v674
        %v694 = vpack.c.b16 %v677, %v676
        %v695 = vpack.c.b16 %v679, %v678
        %vm696 = vcmask 523264
        %v698 = vsel %vm696, %v576, 0
        %v701 = vsel %vm696, %v577, 0
        %v704 = vsel %vm696, %v578, 0
        %v707 = vsel %vm696, %v579, 0
        %v710 = vsel %vm696, %v580, 0
        %v713 = vsel %vm696, %v581, 0
        %v716 = vsel %vm696, %v582, 0
        %v719 = vsel %vm696, %v583, 0
        %v722 = vsel %vm696, %v680, 0
        %v725 = vsel %vm696, %v681, 0
        %v728 = vsel %vm696, %v682, 0
        %v731 = vsel %vm696, %v683, 0
        %v734 = vsel %vm696, %v684, 0
        %v737 = vsel %vm696, %v685, 0
        %v740 = vsel %vm696, %v686, 0
        %v743 = vsel %vm696, %v687, 0
        %v746 = vsel %vm696, %v688, 0
        %v749 = vsel %vm696, %v689, 0
        %v752 = vsel %vm696, %v690, 0
        %v755 = vsel %vm696, %v691, 0
        %v758 = vsel %vm696, %v692, 0
        %v761 = vsel %vm696, %v693, 0
        %v764 = vsel %vm696, %v694, 0
        %v767 = vsel %vm696, %v695, 0
        %769 = vmatprep.subr.bf16.mxu0 0
        %770 = vmatpush1.bf16.xpose.msra.mxu0 %v743
        %771 = vmatprep.subr.bf16.mxu0 0
        %772 = vmatpush1.bf16.xpose.msra.mxu0 %v740
        %773 = vmatprep.subr.bf16.mxu0 0
        %774 = vmatpush1.bf16.xpose.msra.mxu0 %v737
        %775 = vmatprep.subr.bf16.mxu0 0
        %776 = vmatpush1.bf16.xpose.msra.mxu0 %v734
        %777 = vmatprep.subr.bf16.mxu0 0
        %778 = vmatpush1.bf16.xpose.msra.mxu0 %v731
        %779 = vmatprep.subr.bf16.mxu0 0
        %780 = vmatpush1.bf16.xpose.msra.mxu0 %v728
        %781 = vmatprep.subr.bf16.mxu0 0
        %782 = vmatpush1.bf16.xpose.msra.mxu0 %v725
        %783 = vmatprep.subr.bf16.mxu0 0
        %784 = vmatpush1.bf16.xpose.msra.mxu0 %v722
        %785 = vmatprep.subr.bf16.mxu0 0
        %786 = vmatpush2.bf16.xpose.msra.mxu0 %v767
        %787 = vmatprep.subr.bf16.mxu0 0
        %788 = vmatpush2.bf16.xpose.msra.mxu0 %v764
        %789 = vmatprep.subr.bf16.mxu0 0
        %790 = vmatpush2.bf16.xpose.msra.mxu0 %v761
        %791 = vmatprep.subr.bf16.mxu0 0
        %792 = vmatpush2.bf16.xpose.msra.mxu0 %v758
        %793 = vmatprep.subr.bf16.mxu0 0
        %794 = vmatpush2.bf16.xpose.msra.mxu0 %v755
        %795 = vmatprep.subr.bf16.mxu0 0
        %796 = vmatpush2.bf16.xpose.msra.mxu0 %v752
        %797 = vmatprep.subr.bf16.mxu0 0
        %798 = vmatpush2.bf16.xpose.msra.mxu0 %v749
        %799 = vmatprep.subr.bf16.mxu0 0
        %800 = vmatpush2.bf16.xpose.msra.mxu0 %v746
        %801 = vmatprep.mubr.bf16.mxu0 0
        %802 = vmatmul.mubr.bf16.gmra.mxu0 %v698
        %v803 = vpop.f32.mrf.mxu0
        %v804 = vadd.f32 0.0, %v803
        %v805 = vpop.f32.mrf.mxu0
        %v806 = vadd.f32 0.0, %v805
        %v807 = vpop.f32.mrf.mxu0
        %v808 = vadd.f32 0.0, %v807
        %v809 = vpop.f32.mrf.mxu0
        %v810 = vadd.f32 0.0, %v809
        %811 = vmatprep.mubr.bf16.mxu0 0
        %812 = vmatmul.mubr.bf16.gmra.mxu0 %v701
        %v813 = vpop.f32.mrf.mxu0
        %v814 = vadd.f32 0.0, %v813
        %v815 = vpop.f32.mrf.mxu0
        %v816 = vadd.f32 0.0, %v815
        %v817 = vpop.f32.mrf.mxu0
        %v818 = vadd.f32 0.0, %v817
        %v819 = vpop.f32.mrf.mxu0
        %v820 = vadd.f32 0.0, %v819
        %821 = vmatprep.mubr.bf16.mxu0 0
        %822 = vmatmul.mubr.bf16.gmra.mxu0 %v704
        %v823 = vpop.f32.mrf.mxu0
        %v824 = vadd.f32 0.0, %v823
        %v825 = vpop.f32.mrf.mxu0
        %v826 = vadd.f32 0.0, %v825
        %v827 = vpop.f32.mrf.mxu0
        %v828 = vadd.f32 0.0, %v827
        %v829 = vpop.f32.mrf.mxu0
        %v830 = vadd.f32 0.0, %v829
        %831 = vmatprep.mubr.bf16.mxu0 0
        %832 = vmatmul.mubr.bf16.gmra.mxu0 %v707
        %v833 = vpop.f32.mrf.mxu0
        %v834 = vadd.f32 0.0, %v833
        %v835 = vpop.f32.mrf.mxu0
        %v836 = vadd.f32 0.0, %v835
        %v837 = vpop.f32.mrf.mxu0
        %v838 = vadd.f32 0.0, %v837
        %v839 = vpop.f32.mrf.mxu0
        %v840 = vadd.f32 0.0, %v839
        %841 = vmatprep.mubr.bf16.mxu0 0
        %842 = vmatmul.mubr.bf16.gmra.mxu0 %v710
        %v843 = vpop.f32.mrf.mxu0
        %v844 = vadd.f32 0.0, %v843
        %v845 = vpop.f32.mrf.mxu0
        %v846 = vadd.f32 0.0, %v845
        %v847 = vpop.f32.mrf.mxu0
        %v848 = vadd.f32 0.0, %v847
        %v849 = vpop.f32.mrf.mxu0
        %v850 = vadd.f32 0.0, %v849
        %851 = vmatprep.mubr.bf16.mxu0 0
        %852 = vmatmul.mubr.bf16.gmra.mxu0 %v713
        %v853 = vpop.f32.mrf.mxu0
        %v854 = vadd.f32 0.0, %v853
        %v855 = vpop.f32.mrf.mxu0
        %v856 = vadd.f32 0.0, %v855
        %v857 = vpop.f32.mrf.mxu0
        %v858 = vadd.f32 0.0, %v857
        %v859 = vpop.f32.mrf.mxu0
        %v860 = vadd.f32 0.0, %v859
        %861 = vmatprep.mubr.bf16.mxu0 0
        %862 = vmatmul.mubr.bf16.gmra.mxu0 %v716
        %v863 = vpop.f32.mrf.mxu0
        %v864 = vadd.f32 0.0, %v863
        %v865 = vpop.f32.mrf.mxu0
        %v866 = vadd.f32 0.0, %v865
        %v867 = vpop.f32.mrf.mxu0
        %v868 = vadd.f32 0.0, %v867
        %v869 = vpop.f32.mrf.mxu0
        %v870 = vadd.f32 0.0, %v869
        %871 = vmatprep.mubr.bf16.mxu0 0
        %872 = vmatmul.mubr.bf16.gmra.mxu0 %v719
        %v873 = vpop.f32.mrf.mxu0
        %v874 = vadd.f32 0.0, %v873
        %v875 = vpop.f32.mrf.mxu0
        %v876 = vadd.f32 0.0, %v875
        %v877 = vpop.f32.mrf.mxu0
        %v878 = vadd.f32 0.0, %v877
        %v879 = vpop.f32.mrf.mxu0
        %v880 = vadd.f32 0.0, %v879
        %881 = vdwg.mxu0
        %v882 = vmax.f32 %v804, %v806
        %883 = vmax.xlane.f32.xlu0 %v882
        %v884 = vpop.xlane.xlu0 %883
        %v885 = vmax.f32 %v808, %v810
        %886 = vmax.xlane.f32.xlu0 %v885
        %v887 = vpop.xlane.xlu0 %886
        %v888 = vmax.f32 %v814, %v816
        %889 = vmax.xlane.f32.xlu0 %v888
        %v890 = vpop.xlane.xlu0 %889
        %v891 = vmax.f32 %v818, %v820
        %892 = vmax.xlane.f32.xlu0 %v891
        %v893 = vpop.xlane.xlu0 %892
        %v894 = vmax.f32 %v824, %v826
        %895 = vmax.xlane.f32.xlu0 %v894
        %v896 = vpop.xlane.xlu0 %895
        %v897 = vmax.f32 %v828, %v830
        %898 = vmax.xlane.f32.xlu0 %v897
        %v899 = vpop.xlane.xlu0 %898
        %v900 = vmax.f32 %v834, %v836
        %901 = vmax.xlane.f32.xlu0 %v900
        %v902 = vpop.xlane.xlu0 %901
        %v903 = vmax.f32 %v838, %v840
        %904 = vmax.xlane.f32.xlu0 %v903
        %v905 = vpop.xlane.xlu0 %904
        %v906 = vmax.f32 %v844, %v846
        %907 = vmax.xlane.f32.xlu0 %v906
        %v908 = vpop.xlane.xlu0 %907
        %v909 = vmax.f32 %v848, %v850
        %910 = vmax.xlane.f32.xlu0 %v909
        %v911 = vpop.xlane.xlu0 %910
        %v912 = vmax.f32 %v854, %v856
        %913 = vmax.xlane.f32.xlu0 %v912
        %v914 = vpop.xlane.xlu0 %913
        %v915 = vmax.f32 %v858, %v860
        %916 = vmax.xlane.f32.xlu0 %v915
        %v917 = vpop.xlane.xlu0 %916
        %v918 = vmax.f32 %v864, %v866
        %919 = vmax.xlane.f32.xlu0 %v918
        %v920 = vpop.xlane.xlu0 %919
        %v921 = vmax.f32 %v868, %v870
        %922 = vmax.xlane.f32.xlu0 %v921
        %v923 = vpop.xlane.xlu0 %922
        %v924 = vmax.f32 %v874, %v876
        %925 = vmax.xlane.f32.xlu0 %v924
        %v926 = vpop.xlane.xlu0 %925
        %v927 = vmax.f32 %v878, %v880
        %928 = vmax.xlane.f32.xlu0 %v927
        %v929 = vpop.xlane.xlu0 %928
        %v930 = vsub.f32 %v804, %v884
        %v931 = vsub.f32 %v806, %v884
        %v932 = vsub.f32 %v808, %v887
        %v933 = vsub.f32 %v810, %v887
        %v934 = vsub.f32 %v814, %v890
        %v935 = vsub.f32 %v816, %v890
        %v936 = vsub.f32 %v818, %v893
        %v937 = vsub.f32 %v820, %v893
        %v938 = vsub.f32 %v824, %v896
        %v939 = vsub.f32 %v826, %v896
        %v940 = vsub.f32 %v828, %v899
        %v941 = vsub.f32 %v830, %v899
        %v942 = vsub.f32 %v834, %v902
        %v943 = vsub.f32 %v836, %v902
        %v944 = vsub.f32 %v838, %v905
        %v945 = vsub.f32 %v840, %v905
        %v946 = vsub.f32 %v844, %v908
        %v947 = vsub.f32 %v846, %v908
        %v948 = vsub.f32 %v848, %v911
        %v949 = vsub.f32 %v850, %v911
        %v950 = vsub.f32 %v854, %v914
        %v951 = vsub.f32 %v856, %v914
        %v952 = vsub.f32 %v858, %v917
        %v953 = vsub.f32 %v860, %v917
        %v954 = vsub.f32 %v864, %v920
        %v955 = vsub.f32 %v866, %v920
        %v956 = vsub.f32 %v868, %v923
        %v957 = vsub.f32 %v870, %v923
        %v958 = vsub.f32 %v874, %v926
        %v959 = vsub.f32 %v876, %v926
        %v960 = vsub.f32 %v878, %v929
        %v961 = vsub.f32 %v880, %v929
        %v962 = vmul.f32 %v930, 1.442695
        %v963 = vpow.pop %v962
        %v964 = vmul.f32 %v931, 1.442695
        %v965 = vpow.pop %v964
        %v966 = vmul.f32 %v932, 1.442695
        %v967 = vpow.pop %v966
        %v968 = vmul.f32 %v933, 1.442695
        %v969 = vpow.pop %v968
        %v970 = vmul.f32 %v934, 1.442695
        %v971 = vpow.pop %v970
        %v972 = vmul.f32 %v935, 1.442695
        %v973 = vpow.pop %v972
        %v974 = vmul.f32 %v936, 1.442695
        %v975 = vpow.pop %v974
        %v976 = vmul.f32 %v937, 1.442695
        %v977 = vpow.pop %v976
        %v978 = vmul.f32 %v938, 1.442695
        %v979 = vpow.pop %v978
        %v980 = vmul.f32 %v939, 1.442695
        %v981 = vpow.pop %v980
        %v982 = vmul.f32 %v940, 1.442695
        %v983 = vpow.pop %v982
        %v984 = vmul.f32 %v941, 1.442695
        %v985 = vpow.pop %v984
        %v986 = vmul.f32 %v942, 1.442695
        %v987 = vpow.pop %v986
        %v988 = vmul.f32 %v943, 1.442695
        %v989 = vpow.pop %v988
        %v990 = vmul.f32 %v944, 1.442695
        %v991 = vpow.pop %v990
        %v992 = vmul.f32 %v945, 1.442695
        %v993 = vpow.pop %v992
        %v994 = vmul.f32 %v946, 1.442695
        %v995 = vpow.pop %v994
        %v996 = vmul.f32 %v947, 1.442695
        %v997 = vpow.pop %v996
        %v998 = vmul.f32 %v948, 1.442695
        %v999 = vpow.pop %v998
        %v1000 = vmul.f32 %v949, 1.442695
        %v1001 = vpow.pop %v1000
        %v1002 = vmul.f32 %v950, 1.442695
        %v1003 = vpow.pop %v1002
        %v1004 = vmul.f32 %v951, 1.442695
        %v1005 = vpow.pop %v1004
        %v1006 = vmul.f32 %v952, 1.442695
        %v1007 = vpow.pop %v1006
        %v1008 = vmul.f32 %v953, 1.442695
        %v1009 = vpow.pop %v1008
        %v1010 = vmul.f32 %v954, 1.442695
        %v1011 = vpow.pop %v1010
        %v1012 = vmul.f32 %v955, 1.442695
        %v1013 = vpow.pop %v1012
        %v1014 = vmul.f32 %v956, 1.442695
        %v1015 = vpow.pop %v1014
        %v1016 = vmul.f32 %v957, 1.442695
        %v1017 = vpow.pop %v1016
        %v1018 = vmul.f32 %v958, 1.442695
        %v1019 = vpow.pop %v1018
        %v1020 = vmul.f32 %v959, 1.442695
        %v1021 = vpow.pop %v1020
        %v1022 = vmul.f32 %v960, 1.442695
        %v1023 = vpow.pop %v1022
        %v1024 = vmul.f32 %v961, 1.442695
        %v1025 = vpow.pop %v1024
        %v1026 = vadd.f32 %v963, %v965
        %1027 = vadd.xlane.f32.xlu0 %v1026
        %v1028 = vpop.xlane.xlu0 %1027
        %v1029 = vadd.f32 %v967, %v969
        %1030 = vadd.xlane.f32.xlu0 %v1029
        %v1031 = vpop.xlane.xlu0 %1030
        %v1032 = vadd.f32 %v971, %v973
        %1033 = vadd.xlane.f32.xlu0 %v1032
        %v1034 = vpop.xlane.xlu0 %1033
        %v1035 = vadd.f32 %v975, %v977
        %1036 = vadd.xlane.f32.xlu0 %v1035
        %v1037 = vpop.xlane.xlu0 %1036
        %v1038 = vadd.f32 %v979, %v981
        %1039 = vadd.xlane.f32.xlu0 %v1038
        %v1040 = vpop.xlane.xlu0 %1039
        %v1041 = vadd.f32 %v983, %v985
        %1042 = vadd.xlane.f32.xlu0 %v1041
        %v1043 = vpop.xlane.xlu0 %1042
        %v1044 = vadd.f32 %v987, %v989
        %1045 = vadd.xlane.f32.xlu0 %v1044
        %v1046 = vpop.xlane.xlu0 %1045
        %v1047 = vadd.f32 %v991, %v993
        %1048 = vadd.xlane.f32.xlu0 %v1047
        %v1049 = vpop.xlane.xlu0 %1048
        %v1050 = vadd.f32 %v995, %v997
        %1051 = vadd.xlane.f32.xlu0 %v1050
        %v1052 = vpop.xlane.xlu0 %1051
        %v1053 = vadd.f32 %v999, %v1001
        %1054 = vadd.xlane.f32.xlu0 %v1053
        %v1055 = vpop.xlane.xlu0 %1054
        %v1056 = vadd.f32 %v1003, %v1005
        %1057 = vadd.xlane.f32.xlu0 %v1056
        %v1058 = vpop.xlane.xlu0 %1057
        %v1059 = vadd.f32 %v1007, %v1009
        %1060 = vadd.xlane.f32.xlu0 %v1059
        %v1061 = vpop.xlane.xlu0 %1060
        %v1062 = vadd.f32 %v1011, %v1013
        %1063 = vadd.xlane.f32.xlu0 %v1062
        %v1064 = vpop.xlane.xlu0 %1063
        %v1065 = vadd.f32 %v1015, %v1017
        %1066 = vadd.xlane.f32.xlu0 %v1065
        %v1067 = vpop.xlane.xlu0 %1066
        %v1068 = vadd.f32 %v1019, %v1021
        %1069 = vadd.xlane.f32.xlu0 %v1068
        %v1070 = vpop.xlane.xlu0 %1069
        %v1071 = vadd.f32 %v1023, %v1025
        %1072 = vadd.xlane.f32.xlu0 %v1071
        %v1073 = vpop.xlane.xlu0 %1072
        %v1074 = vrcp.pop %v1028
        %v1075 = vrcp.pop %v1031
        %v1076 = vrcp.pop %v1034
        %v1077 = vrcp.pop %v1037
        %v1078 = vrcp.pop %v1040
        %v1079 = vrcp.pop %v1043
        %v1080 = vrcp.pop %v1046
        %v1081 = vrcp.pop %v1049
        %v1082 = vrcp.pop %v1052
        %v1083 = vrcp.pop %v1055
        %v1084 = vrcp.pop %v1058
        %v1085 = vrcp.pop %v1061
        %v1086 = vrcp.pop %v1064
        %v1087 = vrcp.pop %v1067
        %v1088 = vrcp.pop %v1070
        %v1089 = vrcp.pop %v1073
        %v1090 = vmul.f32 %v963, %v1074
        %v1091 = vmul.f32 %v965, %v1074
        %v1092 = vmul.f32 %v967, %v1075
        %v1093 = vmul.f32 %v969, %v1075
        %v1094 = vmul.f32 %v971, %v1076
        %v1095 = vmul.f32 %v973, %v1076
        %v1096 = vmul.f32 %v975, %v1077
        %v1097 = vmul.f32 %v977, %v1077
        %v1098 = vmul.f32 %v979, %v1078
        %v1099 = vmul.f32 %v981, %v1078
        %v1100 = vmul.f32 %v983, %v1079
        %v1101 = vmul.f32 %v985, %v1079
        %v1102 = vmul.f32 %v987, %v1080
        %v1103 = vmul.f32 %v989, %v1080
        %v1104 = vmul.f32 %v991, %v1081
        %v1105 = vmul.f32 %v993, %v1081
        %v1106 = vmul.f32 %v995, %v1082
        %v1107 = vmul.f32 %v997, %v1082
        %v1108 = vmul.f32 %v999, %v1083
        %v1109 = vmul.f32 %v1001, %v1083
        %v1110 = vmul.f32 %v1003, %v1084
        %v1111 = vmul.f32 %v1005, %v1084
        %v1112 = vmul.f32 %v1007, %v1085
        %v1113 = vmul.f32 %v1009, %v1085
        %v1114 = vmul.f32 %v1011, %v1086
        %v1115 = vmul.f32 %v1013, %v1086
        %v1116 = vmul.f32 %v1015, %v1087
        %v1117 = vmul.f32 %v1017, %v1087
        %v1118 = vmul.f32 %v1019, %v1088
        %v1119 = vmul.f32 %v1021, %v1088
        %v1120 = vmul.f32 %v1023, %v1089
        %v1121 = vmul.f32 %v1025, %v1089
        %v1122 = vpack.c.bf16 %v1092, %v1090
        %v1123 = vpack.c.bf16 %v1093, %v1091
        %v1124 = vpack.c.bf16 %v1096, %v1094
        %v1125 = vpack.c.bf16 %v1097, %v1095
        %v1126 = vpack.c.bf16 %v1100, %v1098
        %v1127 = vpack.c.bf16 %v1101, %v1099
        %v1128 = vpack.c.bf16 %v1104, %v1102
        %v1129 = vpack.c.bf16 %v1105, %v1103
        %v1130 = vpack.c.bf16 %v1108, %v1106
        %v1131 = vpack.c.bf16 %v1109, %v1107
        %v1132 = vpack.c.bf16 %v1112, %v1110
        %v1133 = vpack.c.bf16 %v1113, %v1111
        %v1134 = vpack.c.bf16 %v1116, %v1114
        %v1135 = vpack.c.bf16 %v1117, %v1115
        %v1136 = vpack.c.bf16 %v1120, %v1118
        %v1137 = vpack.c.bf16 %v1121, %v1119
        %v1154 = vunpack.c.l.b16 %v1122
        %v1155 = vunpack.c.l.b16 %v1123
        %v1156 = vunpack.c.h.b16 %v1122
        %v1157 = vunpack.c.h.b16 %v1123
        %v1158 = vunpack.c.l.b16 %v1124
        %v1159 = vunpack.c.l.b16 %v1125
        %v1160 = vunpack.c.h.b16 %v1124
        %v1161 = vunpack.c.h.b16 %v1125
        %v1162 = vunpack.c.l.b16 %v1126
        %v1163 = vunpack.c.l.b16 %v1127
        %v1164 = vunpack.c.h.b16 %v1126
        %v1165 = vunpack.c.h.b16 %v1127
        %v1166 = vunpack.c.l.b16 %v1128
        %v1167 = vunpack.c.l.b16 %v1129
        %v1168 = vunpack.c.h.b16 %v1128
        %v1169 = vunpack.c.h.b16 %v1129
        %v1170 = vunpack.c.l.b16 %v1130
        %v1171 = vunpack.c.l.b16 %v1131
        %v1172 = vunpack.c.h.b16 %v1130
        %v1173 = vunpack.c.h.b16 %v1131
        %v1174 = vunpack.c.l.b16 %v1132
        %v1175 = vunpack.c.l.b16 %v1133
        %v1176 = vunpack.c.h.b16 %v1132
        %v1177 = vunpack.c.h.b16 %v1133
        %v1178 = vunpack.c.l.b16 %v1134
        %v1179 = vunpack.c.l.b16 %v1135
        %v1180 = vunpack.c.h.b16 %v1134
        %v1181 = vunpack.c.h.b16 %v1135
        %v1182 = vunpack.c.l.b16 %v1136
        %v1183 = vunpack.c.l.b16 %v1137
        %v1184 = vunpack.c.h.b16 %v1136
        %v1185 = vunpack.c.h.b16 %v1137
        %v1186 = vpack.c.b16 %v1155, %v1154
        %v1187 = vpack.c.b16 %v1157, %v1156
        %v1188 = vpack.c.b16 %v1159, %v1158
        %v1189 = vpack.c.b16 %v1161, %v1160
        %v1190 = vpack.c.b16 %v1163, %v1162
        %v1191 = vpack.c.b16 %v1165, %v1164
        %v1192 = vpack.c.b16 %v1167, %v1166
        %v1193 = vpack.c.b16 %v1169, %v1168
        %v1194 = vpack.c.b16 %v1171, %v1170
        %v1195 = vpack.c.b16 %v1173, %v1172
        %v1196 = vpack.c.b16 %v1175, %v1174
        %v1197 = vpack.c.b16 %v1177, %v1176
        %v1198 = vpack.c.b16 %v1179, %v1178
        %v1199 = vpack.c.b16 %v1181, %v1180
        %v1200 = vpack.c.b16 %v1183, %v1182
        %v1201 = vpack.c.b16 %v1185, %v1184
        %1218 = vst [vmem:[%s335] sm:$0xff] %v1186
        %1219 = vst [vmem:[%s335 + $0x8] sm:$0xff] %v1187
        %1220 = vst [vmem:[%s335 + $0x10] sm:$0xff] %v1188
        %1221 = vst [vmem:[%s335 + $0x18] sm:$0xff] %v1189
        %1222 = vst [vmem:[%s335 + $0x20] sm:$0xff] %v1190
        %1223 = vst [vmem:[%s335 + $0x28] sm:$0xff] %v1191
        %1224 = vst [vmem:[%s335 + $0x30] sm:$0xff] %v1192
        %1225 = vst [vmem:[%s335 + $0x38] sm:$0xff] %v1193
        %1226 = vst [vmem:[%s335 + $0x40] sm:$0xff] %v1194
        %1227 = vst [vmem:[%s335 + $0x48] sm:$0xff] %v1195
        %1228 = vst [vmem:[%s335 + $0x50] sm:$0xff] %v1196
        %1229 = vst [vmem:[%s335 + $0x58] sm:$0xff] %v1197
        %1230 = vst [vmem:[%s335 + $0x60] sm:$0xff] %v1198
        %1231 = vst [vmem:[%s335 + $0x68] sm:$0xff] %v1199
        %1232 = vst [vmem:[%s335 + $0x70] sm:$0xff] %v1200
        %1233 = vst [vmem:[%s335 + $0x78] sm:$0xff] %v1201
        %v1234 = vld [vmem:[%s355] sm:$0xf]
        %v1235 = vld [vmem:[%s355 + $0x4] sm:$0xf]
        %v1236 = vld [vmem:[%s355 + $0x8] sm:$0xf]
        %v1237 = vld [vmem:[%s355 + $0xc] sm:$0xf]
        %v1238 = vld [vmem:[%s355 + $0x10] sm:$0xf]
        %v1239 = vld [vmem:[%s355 + $0x14] sm:$0xf]
        %v1240 = vld [vmem:[%s355 + $0x18] sm:$0xf]
        %v1241 = vld [vmem:[%s355 + $0x1c] sm:$0xf]
        %v1242 = vld [vmem:[%s355 + $0x20] sm:$0xf]
        %v1243 = vld [vmem:[%s355 + $0x24] sm:$0xf]
        %v1244 = vld [vmem:[%s355 + $0x28] sm:$0xf]
        %v1245 = vld [vmem:[%s355 + $0x2c] sm:$0xf]
        %v1246 = vld [vmem:[%s355 + $0x30] sm:$0xf]
        %v1247 = vld [vmem:[%s355 + $0x34] sm:$0xf]
        %v1248 = vld [vmem:[%s355 + $0x38] sm:$0xf]
        %v1249 = vld [vmem:[%s355 + $0x3c] sm:$0xf]
        %v1250 = vld [vmem:[%s355 + $0x40] sm:$0xf]
        %v1251 = vld [vmem:[%s355 + $0x44] sm:$0xf]
        %v1252 = vld [vmem:[%s355 + $0x48] sm:$0xf]
        %v1253 = vld [vmem:[%s355 + $0x4c] sm:$0xf]
        %v1254 = vld [vmem:[%s355 + $0x50] sm:$0xf]
        %v1255 = vld [vmem:[%s355 + $0x54] sm:$0xf]
        %v1256 = vld [vmem:[%s355 + $0x58] sm:$0xf]
        %v1257 = vld [vmem:[%s355 + $0x5c] sm:$0xf]
        %v1258 = vld [vmem:[%s355 + $0x60] sm:$0xf]
        %v1259 = vld [vmem:[%s355 + $0x64] sm:$0xf]
        %v1260 = vld [vmem:[%s355 + $0x68] sm:$0xf]
        %v1261 = vld [vmem:[%s355 + $0x6c] sm:$0xf]
        %v1262 = vld [vmem:[%s355 + $0x70] sm:$0xf]
        %v1263 = vld [vmem:[%s355 + $0x74] sm:$0xf]
        %v1264 = vld [vmem:[%s355 + $0x78] sm:$0xf]
        %v1265 = vld [vmem:[%s355 + $0x7c] sm:$0xf]
        %v1298 = vunpack.c.l.b16 %v1234
        %v1299 = vunpack.c.l.b16 %v1235
        %v1300 = vunpack.c.l.b16 %v1236
        %v1301 = vunpack.c.l.b16 %v1237
        %v1302 = vunpack.c.l.b16 %v1238
        %v1303 = vunpack.c.l.b16 %v1239
        %v1304 = vunpack.c.l.b16 %v1240
        %v1305 = vunpack.c.l.b16 %v1241
        %v1306 = vunpack.c.l.b16 %v1242
        %v1307 = vunpack.c.l.b16 %v1243
        %v1308 = vunpack.c.l.b16 %v1244
        %v1309 = vunpack.c.l.b16 %v1245
        %v1310 = vunpack.c.l.b16 %v1246
        %v1311 = vunpack.c.l.b16 %v1247
        %v1312 = vunpack.c.l.b16 %v1248
        %v1313 = vunpack.c.l.b16 %v1249
        %v1314 = vunpack.c.l.b16 %v1250
        %v1315 = vunpack.c.l.b16 %v1251
        %v1316 = vunpack.c.l.b16 %v1252
        %v1317 = vunpack.c.l.b16 %v1253
        %v1318 = vunpack.c.l.b16 %v1254
        %v1319 = vunpack.c.l.b16 %v1255
        %v1320 = vunpack.c.l.b16 %v1256
        %v1321 = vunpack.c.l.b16 %v1257
        %v1322 = vunpack.c.l.b16 %v1258
        %v1323 = vunpack.c.l.b16 %v1259
        %v1324 = vunpack.c.l.b16 %v1260
        %v1325 = vunpack.c.l.b16 %v1261
        %v1326 = vunpack.c.l.b16 %v1262
        %v1327 = vunpack.c.l.b16 %v1263
        %v1328 = vunpack.c.l.b16 %v1264
        %v1329 = vunpack.c.l.b16 %v1265
        %v1330 = vpack.c.b16 %v1299, %v1298
        %v1331 = vpack.c.b16 %v1301, %v1300
        %v1332 = vpack.c.b16 %v1303, %v1302
        %v1333 = vpack.c.b16 %v1305, %v1304
        %v1334 = vpack.c.b16 %v1307, %v1306
        %v1335 = vpack.c.b16 %v1309, %v1308
        %v1336 = vpack.c.b16 %v1311, %v1310
        %v1337 = vpack.c.b16 %v1313, %v1312
        %v1338 = vpack.c.b16 %v1315, %v1314
        %v1339 = vpack.c.b16 %v1317, %v1316
        %v1340 = vpack.c.b16 %v1319, %v1318
        %v1341 = vpack.c.b16 %v1321, %v1320
        %v1342 = vpack.c.b16 %v1323, %v1322
        %v1343 = vpack.c.b16 %v1325, %v1324
        %v1344 = vpack.c.b16 %v1327, %v1326
        %v1345 = vpack.c.b16 %v1329, %v1328
        %1362 = vmatprep.subr.bf16.mxu0 0
        %1363 = vmatpush1.bf16.msra.mxu0 %v1337
        %1364 = vmatprep.subr.bf16.mxu0 0
        %1365 = vmatpush1.bf16.msra.mxu0 %v1336
        %1366 = vmatprep.subr.bf16.mxu0 0
        %1367 = vmatpush1.bf16.msra.mxu0 %v1335
        %1368 = vmatprep.subr.bf16.mxu0 0
        %1369 = vmatpush1.bf16.msra.mxu0 %v1334
        %1370 = vmatprep.subr.bf16.mxu0 0
        %1371 = vmatpush1.bf16.msra.mxu0 %v1333
        %1372 = vmatprep.subr.bf16.mxu0 0
        %1373 = vmatpush1.bf16.msra.mxu0 %v1332
        %1374 = vmatprep.subr.bf16.mxu0 0
        %1375 = vmatpush1.bf16.msra.mxu0 %v1331
        %1376 = vmatprep.subr.bf16.mxu0 0
        %1377 = vmatpush1.bf16.msra.mxu0 %v1330
        %1378 = vmatprep.subr.bf16.mxu0 0
        %1379 = vmatpush2.bf16.msra.mxu0 %v1345
        %1380 = vmatprep.subr.bf16.mxu0 0
        %1381 = vmatpush2.bf16.msra.mxu0 %v1344
        %1382 = vmatprep.subr.bf16.mxu0 0
        %1383 = vmatpush2.bf16.msra.mxu0 %v1343
        %1384 = vmatprep.subr.bf16.mxu0 0
        %1385 = vmatpush2.bf16.msra.mxu0 %v1342
        %1386 = vmatprep.subr.bf16.mxu0 0
        %1387 = vmatpush2.bf16.msra.mxu0 %v1341
        %1388 = vmatprep.subr.bf16.mxu0 0
        %1389 = vmatpush2.bf16.msra.mxu0 %v1340
        %1390 = vmatprep.subr.bf16.mxu0 0
        %1391 = vmatpush2.bf16.msra.mxu0 %v1339
        %1392 = vmatprep.subr.bf16.mxu0 0
        %1393 = vmatpush2.bf16.msra.mxu0 %v1338
        %1394 = vmatprep.mubr.bf16.mxu0 %v1123
        %1395 = vmatmul.mubr.bf16.gmra.mxu0 %v1122
        %v1396 = vpop.f32.mrf.mxu0
        %v1397 = vadd.f32 0.0, %v1396
        %v1398 = vpop.f32.mrf.mxu0
        %v1399 = vpop.f32.mrf.mxu0
        %v1400 = vadd.f32 0.0, %v1399
        %v1401 = vpop.f32.mrf.mxu0
        %1402 = vmatprep.mubr.bf16.mxu0 %v1125
        %1403 = vmatmul.mubr.bf16.gmra.mxu0 %v1124
        %v1404 = vpop.f32.mrf.mxu0
        %v1405 = vadd.f32 0.0, %v1404
        %v1406 = vpop.f32.mrf.mxu0
        %v1407 = vpop.f32.mrf.mxu0
        %v1408 = vadd.f32 0.0, %v1407
        %v1409 = vpop.f32.mrf.mxu0
        %1410 = vmatprep.mubr.bf16.mxu0 %v1127
        %1411 = vmatmul.mubr.bf16.gmra.mxu0 %v1126
        %v1412 = vpop.f32.mrf.mxu0
        %v1413 = vadd.f32 0.0, %v1412
        %v1414 = vpop.f32.mrf.mxu0
        %v1415 = vpop.f32.mrf.mxu0
        %v1416 = vadd.f32 0.0, %v1415
        %v1417 = vpop.f32.mrf.mxu0
        %1418 = vmatprep.mubr.bf16.mxu0 %v1129
        %1419 = vmatmul.mubr.bf16.gmra.mxu0 %v1128
        %v1420 = vpop.f32.mrf.mxu0
        %v1421 = vadd.f32 0.0, %v1420
        %v1422 = vpop.f32.mrf.mxu0
        %v1423 = vpop.f32.mrf.mxu0
        %v1424 = vadd.f32 0.0, %v1423
        %v1425 = vpop.f32.mrf.mxu0
        %1426 = vmatprep.mubr.bf16.mxu0 %v1131
        %1427 = vmatmul.mubr.bf16.gmra.mxu0 %v1130
        %v1428 = vpop.f32.mrf.mxu0
        %v1429 = vadd.f32 0.0, %v1428
        %v1430 = vpop.f32.mrf.mxu0
        %v1431 = vpop.f32.mrf.mxu0
        %v1432 = vadd.f32 0.0, %v1431
        %v1433 = vpop.f32.mrf.mxu0
        %1434 = vmatprep.mubr.bf16.mxu0 %v1133
        %1435 = vmatmul.mubr.bf16.gmra.mxu0 %v1132
        %v1436 = vpop.f32.mrf.mxu0
        %v1437 = vadd.f32 0.0, %v1436
        %v1438 = vpop.f32.mrf.mxu0
        %v1439 = vpop.f32.mrf.mxu0
        %v1440 = vadd.f32 0.0, %v1439
        %v1441 = vpop.f32.mrf.mxu0
        %1442 = vmatprep.mubr.bf16.mxu0 %v1135
        %1443 = vmatmul.mubr.bf16.gmra.mxu0 %v1134
        %v1444 = vpop.f32.mrf.mxu0
        %v1445 = vadd.f32 0.0, %v1444
        %v1446 = vpop.f32.mrf.mxu0
        %v1447 = vpop.f32.mrf.mxu0
        %v1448 = vadd.f32 0.0, %v1447
        %v1449 = vpop.f32.mrf.mxu0
        %1450 = vmatprep.mubr.bf16.mxu0 %v1137
        %1451 = vmatmul.mubr.bf16.gmra.mxu0 %v1136
        %v1452 = vpop.f32.mrf.mxu0
        %v1453 = vadd.f32 0.0, %v1452
        %v1454 = vpop.f32.mrf.mxu0
        %v1455 = vpop.f32.mrf.mxu0
        %v1456 = vadd.f32 0.0, %v1455
        %v1457 = vpop.f32.mrf.mxu0
        %1458 = vdwg.mxu0
        %v1459 = vld [vmem:[%s4] sm:$0xf]
        %v1460 = vld [vmem:[%s4 + $0x4] sm:$0xf]
        %v1461 = vld [vmem:[%s4 + $0x8] sm:$0xf]
        %v1462 = vld [vmem:[%s4 + $0xc] sm:$0xf]
        %v1463 = vld [vmem:[%s4 + $0x10] sm:$0xf]
        %v1464 = vld [vmem:[%s4 + $0x14] sm:$0xf]
        %v1465 = vld [vmem:[%s4 + $0x18] sm:$0xf]
        %v1466 = vld [vmem:[%s4 + $0x1c] sm:$0xf]
        %v1467 = vpack.c.bf16 %v1400, %v1397
        %v1468 = vpack.c.bf16 %v1408, %v1405
        %v1469 = vpack.c.bf16 %v1416, %v1413
        %v1470 = vpack.c.bf16 %v1424, %v1421
        %v1471 = vpack.c.bf16 %v1432, %v1429
        %v1472 = vpack.c.bf16 %v1440, %v1437
        %v1473 = vpack.c.bf16 %v1448, %v1445
        %v1474 = vpack.c.bf16 %v1456, %v1453
        %v1475 = vld [vmem:[%s5] sm:$0xff]
        %v1476 = vld [vmem:[%s5 + $0x8] sm:$0xff]
        %v1477 = vld [vmem:[%s5 + $0x10] sm:$0xff]
        %v1478 = vld [vmem:[%s5 + $0x18] sm:$0xff]
        %v1479 = vld [vmem:[%s5 + $0x20] sm:$0xff]
        %v1480 = vld [vmem:[%s5 + $0x28] sm:$0xff]
        %v1481 = vld [vmem:[%s5 + $0x30] sm:$0xff]
        %v1482 = vld [vmem:[%s5 + $0x38] sm:$0xff]
        %1484 = vset.pattern.permute.xlu0 0
        %1485 = vperm.xlu0 %1484, %v1475
        %v1486 = vpop.permute.xlu0 %1485
        %1489 = vset.pattern.permute.xlu0 0
        %1490 = vperm.xlu0 %1489, %v1476
        %v1491 = vpop.permute.xlu0 %1490
        %1494 = vset.pattern.permute.xlu0 0
        %1495 = vperm.xlu0 %1494, %v1477
        %v1496 = vpop.permute.xlu0 %1495
        %1499 = vset.pattern.permute.xlu0 0
        %1500 = vperm.xlu0 %1499, %v1478
        %v1501 = vpop.permute.xlu0 %1500
        %1504 = vset.pattern.permute.xlu0 0
        %1505 = vperm.xlu0 %1504, %v1479
        %v1506 = vpop.permute.xlu0 %1505
        %1509 = vset.pattern.permute.xlu0 0
        %1510 = vperm.xlu0 %1509, %v1480
        %v1511 = vpop.permute.xlu0 %1510
        %1514 = vset.pattern.permute.xlu0 0
        %1515 = vperm.xlu0 %1514, %v1481
        %v1516 = vpop.permute.xlu0 %1515
        %1519 = vset.pattern.permute.xlu0 0
        %1520 = vperm.xlu0 %1519, %v1482
        %v1521 = vpop.permute.xlu0 %1520
        %v1531 = vunpack.c.l.b16 %v1459
        %v1532 = vunpack.c.l.b16 %v1460
        %v1533 = vunpack.c.l.b16 %v1461
        %v1534 = vunpack.c.l.b16 %v1462
        %v1535 = vunpack.c.l.b16 %v1463
        %v1536 = vunpack.c.l.b16 %v1464
        %v1537 = vunpack.c.l.b16 %v1465
        %v1538 = vunpack.c.l.b16 %v1466
        %v1539 = vpack.c.b16 %v1532, %v1531
        %v1540 = vpack.c.b16 %v1534, %v1533
        %v1541 = vpack.c.b16 %v1536, %v1535
        %v1542 = vpack.c.b16 %v1538, %v1537
        %v1544 = vsel %vm696, %v1539, 0
        %v1547 = vsel %vm696, %v1540, 0
        %v1550 = vsel %vm696, %v1541, 0
        %v1553 = vsel %vm696, %v1542, 0
        %v1556 = vsel %vm696, %v1467, 0
        %v1559 = vsel %vm696, %v1468, 0
        %v1562 = vsel %vm696, %v1469, 0
        %v1565 = vsel %vm696, %v1470, 0
        %v1568 = vsel %vm696, %v1471, 0
        %v1571 = vsel %vm696, %v1472, 0
        %v1574 = vsel %vm696, %v1473, 0
        %v1577 = vsel %vm696, %v1474, 0
        %1579 = vmatprep.subr.bf16.mxu0 0
        %1580 = vmatpush1.bf16.xpose.msra.mxu0 %v1577
        %1581 = vmatprep.subr.bf16.mxu0 0
        %1582 = vmatpush1.bf16.xpose.msra.mxu0 %v1574
        %1583 = vmatprep.subr.bf16.mxu0 0
        %1584 = vmatpush1.bf16.xpose.msra.mxu0 %v1571
        %1585 = vmatprep.subr.bf16.mxu0 0
        %1586 = vmatpush1.bf16.xpose.msra.mxu0 %v1568
        %1587 = vmatprep.subr.bf16.mxu0 0
        %1588 = vmatpush1.bf16.xpose.msra.mxu0 %v1565
        %1589 = vmatprep.subr.bf16.mxu0 0
        %1590 = vmatpush1.bf16.xpose.msra.mxu0 %v1562
        %1591 = vmatprep.subr.bf16.mxu0 0
        %1592 = vmatpush1.bf16.xpose.msra.mxu0 %v1559
        %1593 = vmatprep.subr.bf16.mxu0 0
        %1594 = vmatpush1.bf16.xpose.msra.mxu0 %v1556
        %1595 = vmatprep.subr.bf16.mxu0 0
        %1596 = vmatpush2.bf16.xpose.msra.mxu0 0
        %1597 = vmatprep.subr.bf16.mxu0 0
        %1598 = vmatpush2.bf16.xpose.msra.mxu0 0
        %1599 = vmatprep.subr.bf16.mxu0 0
        %1600 = vmatpush2.bf16.xpose.msra.mxu0 0
        %1601 = vmatprep.subr.bf16.mxu0 0
        %1602 = vmatpush2.bf16.xpose.msra.mxu0 0
        %1603 = vmatprep.subr.bf16.mxu0 0
        %1604 = vmatpush2.bf16.xpose.msra.mxu0 0
        %1605 = vmatprep.subr.bf16.mxu0 0
        %1606 = vmatpush2.bf16.xpose.msra.mxu0 0
        %1607 = vmatprep.subr.bf16.mxu0 0
        %1608 = vmatpush2.bf16.xpose.msra.mxu0 0
        %1609 = vmatprep.subr.bf16.mxu0 0
        %1610 = vmatpush2.bf16.xpose.msra.mxu0 0
        %1611 = vmatprep.mubr.bf16.mxu0 0
        %1612 = vmatmul.mubr.bf16.gmra.mxu0 %v1544
        %v1613 = vpop.f32.mrf.mxu0
        %v1614 = vadd.f32 %v1486, %v1613
        %v1615 = vpop.f32.mrf.mxu0
        %v1616 = vpop.f32.mrf.mxu0
        %v1617 = vadd.f32 %v1491, %v1616
        %v1618 = vpop.f32.mrf.mxu0
        %1619 = vmatprep.mubr.bf16.mxu0 0
        %1620 = vmatmul.mubr.bf16.gmra.mxu0 %v1547
        %v1621 = vpop.f32.mrf.mxu0
        %v1622 = vadd.f32 %v1496, %v1621
        %v1623 = vpop.f32.mrf.mxu0
        %v1624 = vpop.f32.mrf.mxu0
        %v1625 = vadd.f32 %v1501, %v1624
        %v1626 = vpop.f32.mrf.mxu0
        %1627 = vmatprep.mubr.bf16.mxu0 0
        %1628 = vmatmul.mubr.bf16.gmra.mxu0 %v1550
        %v1629 = vpop.f32.mrf.mxu0
        %v1630 = vadd.f32 %v1506, %v1629
        %v1631 = vpop.f32.mrf.mxu0
        %v1632 = vpop.f32.mrf.mxu0
        %v1633 = vadd.f32 %v1511, %v1632
        %v1634 = vpop.f32.mrf.mxu0
        %1635 = vmatprep.mubr.bf16.mxu0 0
        %1636 = vmatmul.mubr.bf16.gmra.mxu0 %v1553
        %v1637 = vpop.f32.mrf.mxu0
        %v1638 = vadd.f32 %v1516, %v1637
        %v1639 = vpop.f32.mrf.mxu0
        %v1640 = vpop.f32.mrf.mxu0
        %v1641 = vadd.f32 %v1521, %v1640
        %v1642 = vpop.f32.mrf.mxu0
        %1643 = vdwg.mxu0
        %1644 = vst [vmem:[%s328] sm:$0xff] %v1614
        %1645 = vst [vmem:[%s328 + $0x8] sm:$0xff] %v1617
        %1646 = vst [vmem:[%s328 + $0x10] sm:$0xff] %v1622
        %1647 = vst [vmem:[%s328 + $0x18] sm:$0xff] %v1625
        %1648 = vst [vmem:[%s328 + $0x20] sm:$0xff] %v1630
        %1649 = vst [vmem:[%s328 + $0x28] sm:$0xff] %v1633
        %1650 = vst [vmem:[%s328 + $0x30] sm:$0xff] %v1638
        %1651 = vst [vmem:[%s328 + $0x38] sm:$0xff] %v1641
        %s1652 = sand.u32 %s187, 1
        %s1653 = sand.u32 %s187, 1
        %s1654 = smul.addr %s1653, 64
        %s1655 = scalar_lea.vmem [#allocation2], %s1654
        %s1656 = sand.u32 %s215, 1
        %s1657 = scalar_lea.sflag [#allocation4], %s1656
        %s1658 = sand.u32 %s215, 1
        %s1659 = smul.addr %s1658, 128
        %s1660 = scalar_lea.vmem [#allocation3], %s1659
        // Predicated region
        $region45: #{cross_attention_pallas.3} parent=43 // pred_check
          %p1661 = pneg %p197
        $region46: #{cross_attention_pallas.3} parent=43 // pred_check_branch
          %1663 = sbr.rel (%p1661) target = $region48
        $region47: #{cross_attention_pallas.3} parent=43 // pred_region
          %s1664 = smul.addr %s26, 16
          %s1665 = sadd.s32 %s27, %s1664
          %s1666 = smul.addr %s1665, 8
          %s1667 = scalar_lea.vmem %s6, %s1666
          // Predicated region
          $region49: #{cross_attention_pallas.3} parent=47 // pred_check
            _
          $region50: #{cross_attention_pallas.3} parent=47 // pred_check_branch
            %1669 = sbr.rel (0) target = $region52
          $region51: #{cross_attention_pallas.3} parent=47 // pred_region
            // Predicated region
            $region53: #{cross_attention_pallas.3} parent=51 // pred_check
              _
            $region54: #{cross_attention_pallas.3} parent=51 // pred_check_branch
              %1671 = sbr.rel (0) target = $region56
            $region55: #{cross_attention_pallas.3} parent=51 // pred_region
              // Predicated region
              $region68: #{cross_attention_pallas.3} parent=55 // pred_check
                _
              $region69: #{cross_attention_pallas.3} parent=55 // pred_check_branch
                %1701 = sbr.rel (0) target = $region71
              $region70: #{cross_attention_pallas.3} parent=55 // pred_region
                loop: start=0, step=1, limit=1
                $region72: #{cross_attention_pallas.3} parent=70 // loop_pre_header
                  _
                $region73: #{cross_attention_pallas.3} parent=70 // loop_header
                  %s1703 = sphi 0, %s1707
                  %p1704 = scmp.ge.s32.totalorder %s1703, 1
                  %s1708 = sphi %s1655, %s1655
                  %s1709 = sphi %s1667, %s1667
                $region74: #{cross_attention_pallas.3} parent=70 // loop_header_branch
                  %1706 = sbr.rel (%p1704) target = $region78
                $region75: #{cross_attention_pallas.3} parent=70 // loop_body
                  %v1710 = vld [vmem:[%s1708] sm:$0xff]
                  %1711 = vst [vmem:[%s1709] sm:$0xff] %v1710
                  %v1712 = vld [vmem:[%s1708 + $0x8] sm:$0xff]
                  %1713 = vst [vmem:[%s1709 + $0x10] sm:$0xff] %v1712
                  %v1714 = vld [vmem:[%s1708 + $0x10] sm:$0xff]
                  %1715 = vst [vmem:[%s1709 + $0x20] sm:$0xff] %v1714
                  %v1716 = vld [vmem:[%s1708 + $0x18] sm:$0xff]
                  %1717 = vst [vmem:[%s1709 + $0x30] sm:$0xff] %v1716
                  %v1718 = vld [vmem:[%s1708 + $0x20] sm:$0xff]
                  %1719 = vst [vmem:[%s1709 + $0x40] sm:$0xff] %v1718
                  %v1720 = vld [vmem:[%s1708 + $0x28] sm:$0xff]
                  %1721 = vst [vmem:[%s1709 + $0x50] sm:$0xff] %v1720
                  %v1722 = vld [vmem:[%s1708 + $0x30] sm:$0xff]
                  %1723 = vst [vmem:[%s1709 + $0x60] sm:$0xff] %v1722
                  %v1724 = vld [vmem:[%s1708 + $0x38] sm:$0xff]
                  %1725 = vst [vmem:[%s1709 + $0x70] sm:$0xff] %v1724
                $region76: #{cross_attention_pallas.3} parent=70 // loop_footer
                  %s1707 = sadd.s32 1, %s1703
                $region77: #{cross_attention_pallas.3} parent=70 // loop_footer_branch
                  %1702 = sbr.rel target = $region73
                $region78: #{cross_attention_pallas.3} parent=70 // loop_exit
                  _
              $region71: #{cross_attention_pallas.3} parent=55 // pred_fallthru
                _
              // Predicated region
              $region79: #{cross_attention_pallas.3} parent=55 // pred_check
                _
              $region80: #{cross_attention_pallas.3} parent=55 // pred_check_branch
                %1727 = sbr.rel target = $region82
              $region81: #{cross_attention_pallas.3} parent=55 // pred_region
                _
              $region82: #{cross_attention_pallas.3} parent=55 // pred_fallthru
                _
            $region56: #{cross_attention_pallas.3} parent=51 // pred_fallthru
              _
            // Predicated region
            $region57: #{cross_attention_pallas.3} parent=51 // pred_check
              _
            $region58: #{cross_attention_pallas.3} parent=51 // pred_check_branch
              %1673 = sbr.rel target = $region60
            $region59: #{cross_attention_pallas.3} parent=51 // pred_region
              %s1675 = ssub.s32 256, 1
              loop: start=0, step=1, limit=1
              $region61: #{cross_attention_pallas.3} parent=59 // loop_pre_header
                _
              $region62: #{cross_attention_pallas.3} parent=59 // loop_header
                %s1677 = sphi 0, %s1681
                %p1678 = scmp.ge.s32.totalorder %s1677, 1
                %s1682 = sphi %s1655, %s1655
                %s1683 = sphi %s1667, %s1667
              $region63: #{cross_attention_pallas.3} parent=59 // loop_header_branch
                %1680 = sbr.rel (%p1678) target = $region67
              $region64: #{cross_attention_pallas.3} parent=59 // loop_body
                %v1684 = vld [vmem:[%s1682] sm:%s1675]
                %1685 = vst [vmem:[%s1683] sm:%s1675] %v1684
                %v1686 = vld [vmem:[%s1682 + $0x8] sm:%s1675]
                %1687 = vst [vmem:[%s1683 + $0x10] sm:%s1675] %v1686
                %v1688 = vld [vmem:[%s1682 + $0x10] sm:%s1675]
                %1689 = vst [vmem:[%s1683 + $0x20] sm:%s1675] %v1688
                %v1690 = vld [vmem:[%s1682 + $0x18] sm:%s1675]
                %1691 = vst [vmem:[%s1683 + $0x30] sm:%s1675] %v1690
                %v1692 = vld [vmem:[%s1682 + $0x20] sm:%s1675]
                %1693 = vst [vmem:[%s1683 + $0x40] sm:%s1675] %v1692
                %v1694 = vld [vmem:[%s1682 + $0x28] sm:%s1675]
                %1695 = vst [vmem:[%s1683 + $0x50] sm:%s1675] %v1694
                %v1696 = vld [vmem:[%s1682 + $0x30] sm:%s1675]
                %1697 = vst [vmem:[%s1683 + $0x60] sm:%s1675] %v1696
                %v1698 = vld [vmem:[%s1682 + $0x38] sm:%s1675]
                %1699 = vst [vmem:[%s1683 + $0x70] sm:%s1675] %v1698
              $region65: #{cross_attention_pallas.3} parent=59 // loop_footer
                %s1681 = sadd.s32 1, %s1677
              $region66: #{cross_attention_pallas.3} parent=59 // loop_footer_branch
                %1676 = sbr.rel target = $region62
              $region67: #{cross_attention_pallas.3} parent=59 // loop_exit
                _
            $region60: #{cross_attention_pallas.3} parent=51 // pred_fallthru
              _
          $region52: #{cross_attention_pallas.3} parent=47 // pred_fallthru
            _
          %1728 = vnop
        $region48: #{cross_attention_pallas.3} parent=43 // pred_fallthru
          _
        // Predicated region
        $region83: #{cross_attention_pallas.3} parent=43 // pred_check
          %p1729 = pneg %p225
        $region84: #{cross_attention_pallas.3} parent=43 // pred_check_branch
          %1731 = sbr.rel (%p1729) target = $region86
        $region85: #{cross_attention_pallas.3} parent=43 // pred_region
          %s1732 = smul.u32 16, %s27
          %s1734 = ssub.s32 2048, 2048
          %1735 = vsyncadd %s1657, %s1734
          %s1736 = smul.addr %s1732, 2
          %s1737 = smul.addr %s26, 64
          %s1738 = sadd.s32 %s1736, %s1737
          %s1739 = smul.addr %s1738, 64
          %s1740 = scalar_lea.hbm %s7, %s1739
          %s1741 = sshll.u32 %s1660, 4
          %s1742 = int_to_ptr.vmem [resolvable:$true] %s1741
          %1747 = dma.vmem_to_hbm [thread:$0]  %s1742, 2048, %s1740, %s1657, 128, 128, 8
        $region86: #{cross_attention_pallas.3} parent=43 // pred_fallthru
          _
      $region44: #{cross_attention_pallas.3} parent=5 // pred_fallthru
        _
      %p1748 = scmp.le.s32.totalorder 2, %s17
      // Predicated region
      $region87: #{cross_attention_pallas.3} parent=5 // pred_check
        %p1749 = pneg %p1748
      $region88: #{cross_attention_pallas.3} parent=5 // pred_check_branch
        %1751 = sbr.rel (%p1749) target = $region90
      $region89: #{cross_attention_pallas.3} parent=5 // pred_region
        %s1752 = ssub.s32 %s17, 2
        // Predicated region
        $region91: #{cross_attention_pallas.3} parent=89 // pred_check
          %p1753 = pneg %p203
        $region92: #{cross_attention_pallas.3} parent=89 // pred_check_branch
          %1755 = sbr.rel (%p1753) target = $region94
        $region93: #{cross_attention_pallas.3} parent=89 // pred_region
          %s1756 = sand.u32 %s188, 1
          %s1757 = sand.u32 %s188, 1
          %s1758 = smul.addr %s1757, 64
          %s1759 = scalar_lea.vmem [#allocation2], %s1758
        $region94: #{cross_attention_pallas.3} parent=89 // pred_fallthru
          _
        // Predicated region
        $region95: #{cross_attention_pallas.3} parent=89 // pred_check
          %p1760 = pneg %p231
        $region96: #{cross_attention_pallas.3} parent=89 // pred_check_branch
          %1762 = sbr.rel (%p1760) target = $region98
        $region97: #{cross_attention_pallas.3} parent=89 // pred_region
          %s1763 = sand.u32 %s216, 1
          %s1764 = scalar_lea.sflag [#allocation4], %s1763
          %s1765 = sand.u32 %s216, 1
          %s1766 = smul.addr %s1765, 128
          %s1767 = scalar_lea.vmem [#allocation3], %s1766
          %1768 = dma.done %s1764, 2048
        $region98: #{cross_attention_pallas.3} parent=89 // pred_fallthru
          _
      $region90: #{cross_attention_pallas.3} parent=5 // pred_fallthru
        _
    $region6: #{cross_attention_pallas.3} parent=1 // loop_footer
      %s21 = sadd.s32 1, %s17
    $region7: #{cross_attention_pallas.3} parent=1 // loop_footer_branch
      %16 = sbr.rel target = $region3
    $region8: #{cross_attention_pallas.3} parent=1 // loop_exit
      _
    %1769 = vsyncpa [#allocation4], 1
    %s1770 = scalar_lea.sflag [#allocation4], 1
    %1771 = vsyncpa %s1770, 1

</llo_original>
